<compile_context>
chip_gen: v6e
topology: v6e:2x2x1
jax: 0.10.0
libtpu: 0.0.40
codegen_flags: <defaults>
</compile_context>

<pallas_src>
import numpy as np

import jax
import jax.numpy as jnp
from jax import lax
from jax.experimental import pallas as pl
from jax.experimental.pallas import tpu as pltpu


# ------------------------------ Pallas kernel ------------------------------ #

def _fused_cnn_kernel(x_ref, t1_ref, ep1_ref, se1_ref,
                      t2_ref, ep2_ref, se2_ref,
                      w1_ref, fb1_ref, w2_ref, fb2_ref,
                      o_ref, xp2_ref, fcin_ref):
    """Whole Cutomized_CNN forward on VMEM-resident data.

    x_ref    : (N, H+2, W*Cin)  row-padded, width-packed input (lane = w*Cin+c)
    t*_ref   : (3, W*Cin, W*Cout) block-Toeplitz conv weights (per kernel row)
    ep*_ref  : (3, W*Cout)      rows = [conv bias, BN scale, BN shift], tiled per lane
    se*_ref  : (2, H/2, H)      even / odd output-row selectors for the 2x2 pool
    w1_ref   : (flat, dense)    fc1 weight, rows already permuted to kernel layout
    w2_ref   : (dense, classes) fc2 weight (pre-transposed)
    xp2_ref  : (H/2+2, ...)     VMEM scratch: row-padded input of conv block 2
    fcin_ref : (N, flat)        VMEM scratch: flattened FC input
    """
    f32 = jnp.float32
    n_batch = x_ref.shape[0]
    h1 = x_ref.shape[1] - 2           # conv1 spatial height (=16)
    h2 = xp2_ref.shape[0] - 2         # conv2 spatial height (=8)

    def conv_relu_bn_pool(xpad, t_ref, ep_ref, se_ref, h):
        half = t_ref.shape[2] // 2
        # 3x3 'same' conv == 3 matmuls of consecutive row windows vs Toeplitz taps.
        acc = jnp.dot(xpad[0:h, :], t_ref[0], preferred_element_type=f32)
        acc = acc + jnp.dot(xpad[1:h + 1, :], t_ref[1], preferred_element_type=f32)
        acc = acc + jnp.dot(xpad[2:h + 2, :], t_ref[2], preferred_element_type=f32)
        # Module order: activation(conv(x) + b)  ->  BatchNorm (eval affine).
        y = jnp.maximum(acc + ep_ref[0:1, :], 0.0)
        y = y * ep_ref[1:2, :] + ep_ref[2:3, :]
        # 2x2 max-pool, fused:
        #   width pairs  -> the two column-permuted halves (T stores even-w | odd-w)
        #   height pairs -> 0/1 even/odd row-selector matmuls.
        z = jnp.maximum(y[:, :half], y[:, half:])
        return jnp.maximum(jnp.dot(se_ref[0], z, preferred_element_type=f32),
                           jnp.dot(se_ref[1], z, preferred_element_type=f32))

    for n in range(n_batch):          # batch is tiny and static -> unrolled
        # ---- block 1: conv(4->8,3x3,pad1) + ReLU + BN + maxpool ---- (8, 64)
        p1 = conv_relu_bn_pool(x_ref[n], t1_ref, ep1_ref, se1_ref, h1)

        # ---- block 2 input: zero-row padding built directly in VMEM scratch
        zero_row = jnp.zeros((1, xp2_ref.shape[1]), f32)
        xp2_ref[0:1, :] = zero_row
        xp2_ref[h2 + 1:h2 + 2, :] = zero_row
        xp2_ref[1:h2 + 1, :] = p1

        # ---- block 2: conv(8->16,3x3,pad1) + ReLU + BN + maxpool ---- (4, 64)
        p2 = conv_relu_bn_pool(xp2_ref[...], t2_ref, ep2_ref, se2_ref, h2)

        # ---- flatten into the FC input row (NCHW .view order is absorbed into
        #      the pre-permuted fc1 weight, so a plain row-major copy suffices)
        chunk = p2.shape[1]
        for r in range(p2.shape[0]):
            fcin_ref[n:n + 1, r * chunk:(r + 1) * chunk] = p2[r:r + 1, :]

    # ---- fc1 (+ dense ReLU) and fc2 for the whole batch, still in VMEM ----
    hid = jnp.maximum(
        jnp.dot(fcin_ref[...], w1_ref[...], preferred_element_type=f32)
        + fb1_ref[...], 0.0)
    o_ref[...] = (jnp.dot(hid, w2_ref[...], preferred_element_type=f32)
                  + fb2_ref[...]).astype(o_ref.dtype)


# ------------------------------ JAX wrapper -------------------------------- #

def customized_cnn_forward(x_nchw, packed):
    """Forward pass. One tiny layout prep + a single fused pallas_call."""
    n, cin, h, w = x_nchw.shape
    # NCHW -> (N, H+2, W*Cin): width-packed lanes, 1 zero row of padding top/bottom
    # (width padding is folded into the Toeplitz weights).
    xp = jnp.pad(jnp.transpose(x_nchw, (0, 2, 3, 1)).reshape(n, h, w * cin),
                 ((0, 0), (1, 1), (0, 0)))

    h2 = h // 2                               # spatial after the first pool
    c2_width = packed["t2"].shape[1]          # (W/2) * Cout1
    fc_k = packed["fc1_w"].shape[0]           # flattened size
    num_classes = packed["fc2_w"].shape[1]

    vmem = pl.BlockSpec(memory_space=pltpu.MemorySpace.VMEM)
    return pl.pallas_call(
        _fused_cnn_kernel,
        out_shape=jax.ShapeDtypeStruct((n, num_classes), jnp.float32),
        in_specs=[vmem] * 11,
        out_specs=vmem,
        scratch_shapes=[pltpu.VMEM((h2 + 2, c2_width), jnp.float32),
                        pltpu.VMEM((n, fc_k), jnp.float32)],
    )(xp, packed["t1"], packed["ep1"], packed["se1"],
      packed["t2"], packed["ep2"], packed["se2"],
      packed["fc1_w"], packed["fc1_b"], packed["fc2_w"], packed["fc2_b"])


# --------------------- parameter init / one-time packing ------------------- #

def init_params(key, *, input_channels, conv_filters, kernel_sizes,
                dense_neurons, num_classes, spatial, batch_norm=True):
    """PyTorch-layout parameters (Conv2d OIHW, BN running stats, Linear (out,in))."""
    params = {"conv_blocks": []}
    in_ch, s = input_channels, spatial
    for out_ch, k in zip(conv_filters, kernel_sizes):
        assert k == 3, "demo covers 3x3 kernels (padding=1 keeps the spatial size)"
        key, k1, k2, k3, k4, k5, k6 = jax.random.split(key, 7)
        blk = {"w": 0.1 * jax.random.normal(k1, (out_ch, in_ch, k, k), jnp.float32),
               "b": 0.1 * jax.random.normal(k2, (out_ch,), jnp.float32)}
        if batch_norm:
            blk["bn_gamma"] = 1.0 + 0.1 * jax.random.normal(k3, (out_ch,), jnp.float32)
            blk["bn_beta"] = 0.1 * jax.random.normal(k4, (out_ch,), jnp.float32)
            blk["bn_mean"] = 0.1 * jax.random.normal(k5, (out_ch,), jnp.float32)
            blk["bn_var"] = jnp.abs(jax.random.normal(k6, (out_ch,), jnp.float32)) + 0.5
        params["conv_blocks"].append(blk)
        in_ch, s = out_ch, s // 2
    flattened = in_ch * s * s      # flattened size for the demo spatial resolution
    key, k1, k2, k3, k4 = jax.random.split(key, 5)
    params["fc1_w"] = 0.1 * jax.random.normal(k1, (dense_neurons, flattened), jnp.float32)
    params["fc1_b"] = 0.05 * jax.random.normal(k2, (dense_neurons,), jnp.float32)
    params["fc2_w"] = 0.2 * jax.random.normal(k3, (num_classes, dense_neurons), jnp.float32)
    params["fc2_b"] = 0.05 * jax.random.normal(k4, (num_classes,), jnp.float32)
    return params


def pack_params(params, *, spatial, eps=1e-5):
    """Fold / pre-transpose parameters into kernel operands (runs once, host side)."""
    blocks = params["conv_blocks"]
    assert len(blocks) == 2, "fused kernel is specialized to two conv blocks"
    packed = {}
    s = spatial
    for li, p in enumerate(blocks, start=1):
        w = np.asarray(p["w"], np.float32)                   # (Cout, Cin, 3, 3)
        cout, cin, _, _ = w.shape
        assert s % 2 == 0
        width, half = s, (s // 2) * cout
        # Block-Toeplitz taps: acc[h] = sum_kh x_rowpad[h+kh] @ T[kh] is the 3x3
        # 'same' conv on the (rows=h, lanes=w*Cin+ci) layout.  Output columns are
        # ordered (even w | odd w) so the width-pool is a max of the two halves.
        T = np.zeros((3, width * cin, width * cout), np.float32)
        for kh in range(3):
            for w_out in range(width):
                col0 = (w_out % 2) * half + (w_out // 2) * cout
                for kw in range(3):
                    w_in = w_out + kw - 1
                    if 0 <= w_in < width:
                        T[kh, w_in * cin:(w_in + 1) * cin,
                          col0:col0 + cout] = w[:, :, kh, kw].T
        bias = np.asarray(p["b"], np.float32)
        if "bn_gamma" in p:                                   # eval-mode BN
            scale = np.asarray(p["bn_gamma"], np.float32) / np.sqrt(
                np.asarray(p["bn_var"], np.float32) + eps)
            shift = np.asarray(p["bn_beta"], np.float32) - \
                np.asarray(p["bn_mean"], np.float32) * scale
        else:
            scale = np.ones((cout,), np.float32)
            shift = np.zeros((cout,), np.float32)
        ep = np.stack([np.tile(bias, width), np.tile(scale, width),
                       np.tile(shift, width)]).astype(np.float32)   # (3, W*Cout)
        hp = s // 2
        sel = np.zeros((2, hp, s), np.float32)                # even/odd row selectors
        sel[0, np.arange(hp), 2 * np.arange(hp)] = 1.0
        sel[1, np.arange(hp), 2 * np.arange(hp) + 1] = 1.0
        packed[f"t{li}"] = jnp.asarray(T)
        packed[f"ep{li}"] = jnp.asarray(ep)
        packed[f"se{li}"] = jnp.asarray(sel)
        s //= 2

    # fc1: transpose to (K, N) and permute K so the kernel's (h, w*C+c) flatten
    # order matches PyTorch's NCHW .view(N, -1) order (no runtime transpose).
    hf = wf = s
    cf = np.asarray(blocks[-1]["w"]).shape[0]
    hh, ww, cc = np.meshgrid(np.arange(hf), np.arange(wf), np.arange(cf), indexing="ij")
    perm = (cc * (hf * wf) + hh * wf + ww).reshape(-1)        # kernel-k -> pytorch-k
    fc1_w = np.asarray(params["fc1_w"], np.float32)           # (dense, flat)
    assert fc1_w.shape[1] == perm.size
    packed["fc1_w"] = jnp.asarray(np.ascontiguousarray(fc1_w[:, perm].T))  # (flat, dense)
    packed["fc1_b"] = jnp.asarray(np.asarray(params["fc1_b"], np.float32)[None, :])
    packed["fc2_w"] = jnp.asarray(np.asarray(params["fc2_w"], np.float32).T)
    packed["fc2_b"] = jnp.asarray(np.asarray(params["fc2_b"], np.float32)[None, :])
    return packed


# --------------------------- pure-JAX reference ---------------------------- #

def reference_forward(x_nchw, params, eps=1e-5):
    """Direct translation of Cutomized_CNN.forward (high-precision dots)."""
    hi = lax.Precision.HIGHEST
    x = x_nchw
    for p in params["conv_blocks"]:
        x = lax.conv_general_dilated(
            x, p["w"], window_strides=(1, 1), padding=((1, 1), (1, 1)),
            dimension_numbers=("NCHW", "OIHW", "NCHW"), precision=hi)
        x = jnp.maximum(x + p["b"][None, :, None, None], 0.0)      # act(conv(x))
        if "bn_gamma" in p:                                        # then BatchNorm
            scale = p["bn_gamma"] / jnp.sqrt(p["bn_var"] + eps)
            shift = p["bn_beta"] - p["bn_mean"] * scale
            x = x * scale[None, :, None, None] + shift[None, :, None, None]
        n, c, h, w = x.shape                                       # then MaxPool 2x2
        x = x.reshape(n, c, h // 2, 2, w // 2, 2).max(axis=(3, 5))
    n = x.shape[0]
    x = x.reshape(n, -1)                                           # NCHW .view(N,-1)
    x = jnp.maximum(jnp.dot(x, params["fc1_w"].T, precision=hi) + params["fc1_b"], 0.0)
    return jnp.dot(x, params["fc2_w"].T, precision=hi) + params["fc2_b"]


# ----------------------------------- main ----------------------------------- #

if __name__ == "__main__":
    key = jax.random.PRNGKey(0)
    key, xk, pk = jax.random.split(key, 3)

    batch, in_ch, spatial = 2, 4, 16
    x = jax.random.normal(xk, (batch, in_ch, spatial, spatial), jnp.float32)  # NCHW

    params = init_params(pk, input_channels=in_ch, conv_filters=[8, 16],
                         kernel_sizes=[3, 3], dense_neurons=32, num_classes=10,
                         spatial=spatial, batch_norm=True)
    packed = pack_params(params, spatial=spatial)

    fwd = jax.jit(customized_cnn_forward)
    out = jax.block_until_ready(fwd(x, packed))
    assert out.shape == (batch, 10), out.shape

    ref = jax.block_until_ready(reference_forward(x, params))
    max_err = float(jnp.max(jnp.abs(out - ref)))
    assert max_err < 5e-2, f"kernel deviates from reference: max_abs_err={max_err}"

    print("KERNEL_OK")
</pallas_src>

<mosaic_0001>
module attributes {stable_mosaic.version = 11 : i64} {
  func.func @_fused_cnn_kernel(%arg0: memref<2x18x64xf32, #tpu.memory_space<vmem>>, %arg1: memref<3x64x128xf32, #tpu.memory_space<vmem>>, %arg2: memref<3x128xf32, #tpu.memory_space<vmem>>, %arg3: memref<2x8x16xf32, #tpu.memory_space<vmem>>, %arg4: memref<3x64x128xf32, #tpu.memory_space<vmem>>, %arg5: memref<3x128xf32, #tpu.memory_space<vmem>>, %arg6: memref<2x4x8xf32, #tpu.memory_space<vmem>>, %arg7: memref<256x32xf32, #tpu.memory_space<vmem>>, %arg8: memref<1x32xf32, #tpu.memory_space<vmem>>, %arg9: memref<32x10xf32, #tpu.memory_space<vmem>>, %arg10: memref<1x10xf32, #tpu.memory_space<vmem>>, %arg11: memref<2x10xf32, #tpu.memory_space<vmem>>, %arg12: memref<10x64xf32, #tpu.memory_space<vmem>>, %arg13: memref<2x256xf32, #tpu.memory_space<vmem>>) attributes {dimension_semantics = [], scalar_prefetch = 0 : i64, scratch_operands = 2 : i64, tpu.core_type = #tpu.core_type<tc>} {
    %c0 = arith.constant 0 : index
    %c0_0 = arith.constant 0 : index
    %c0_1 = arith.constant 0 : index
    %0 = vector.load %arg0[%c0, %c0_0, %c0_1] : memref<2x18x64xf32, #tpu.memory_space<vmem>>, vector<1x18x64xf32>
    %1 = vector.shape_cast %0 : vector<1x18x64xf32> to vector<18x64xf32>
    %2 = vector.extract_strided_slice %1 {offsets = [0, 0], sizes = [16, 64], strides = [1, 1]} : vector<18x64xf32> to vector<16x64xf32>
    %c0_2 = arith.constant 0 : index
    %c0_3 = arith.constant 0 : index
    %c0_4 = arith.constant 0 : index
    %3 = vector.load %arg1[%c0_2, %c0_3, %c0_4] : memref<3x64x128xf32, #tpu.memory_space<vmem>>, vector<1x64x128xf32>
    %4 = vector.shape_cast %3 : vector<1x64x128xf32> to vector<64x128xf32>
    %cst = arith.constant dense<0.000000e+00> : vector<16x128xf32>
    %5 = tpu.matmul %2, %4, %cst {dimension_numbers = #tpu.dot_dimension_numbers<[1], [0], [0], [1], [0, 0, 1, 1], [], []>} : vector<16x64xf32>, vector<64x128xf32>, vector<16x128xf32> -> vector<16x128xf32>
    %6 = vector.extract_strided_slice %1 {offsets = [1, 0], sizes = [16, 64], strides = [1, 1]} : vector<18x64xf32> to vector<16x64xf32>
    %c1 = arith.constant 1 : index
    %c0_5 = arith.constant 0 : index
    %c0_6 = arith.constant 0 : index
    %7 = vector.load %arg1[%c1, %c0_5, %c0_6] : memref<3x64x128xf32, #tpu.memory_space<vmem>>, vector<1x64x128xf32>
    %8 = vector.shape_cast %7 : vector<1x64x128xf32> to vector<64x128xf32>
    %cst_7 = arith.constant dense<0.000000e+00> : vector<16x128xf32>
    %9 = tpu.matmul %6, %8, %cst_7 {dimension_numbers = #tpu.dot_dimension_numbers<[1], [0], [0], [1], [0, 0, 1, 1], [], []>} : vector<16x64xf32>, vector<64x128xf32>, vector<16x128xf32> -> vector<16x128xf32>
    %10 = arith.addf %5, %9 : vector<16x128xf32>
    %11 = vector.extract_strided_slice %1 {offsets = [2, 0], sizes = [16, 64], strides = [1, 1]} : vector<18x64xf32> to vector<16x64xf32>
    %c2 = arith.constant 2 : index
    %c0_8 = arith.constant 0 : index
    %c0_9 = arith.constant 0 : index
    %12 = vector.load %arg1[%c2, %c0_8, %c0_9] : memref<3x64x128xf32, #tpu.memory_space<vmem>>, vector<1x64x128xf32>
    %13 = vector.shape_cast %12 : vector<1x64x128xf32> to vector<64x128xf32>
    %cst_10 = arith.constant dense<0.000000e+00> : vector<16x128xf32>
    %14 = tpu.matmul %11, %13, %cst_10 {dimension_numbers = #tpu.dot_dimension_numbers<[1], [0], [0], [1], [0, 0, 1, 1], [], []>} : vector<16x64xf32>, vector<64x128xf32>, vector<16x128xf32> -> vector<16x128xf32>
    %15 = arith.addf %10, %14 : vector<16x128xf32>
    %c0_11 = arith.constant 0 : index
    %c0_12 = arith.constant 0 : index
    %16 = vector.load %arg2[%c0_11, %c0_12] : memref<3x128xf32, #tpu.memory_space<vmem>>, vector<1x128xf32>
    %17 = vector.broadcast %16 : vector<1x128xf32> to vector<16x128xf32>
    %18 = arith.addf %15, %17 : vector<16x128xf32>
    %cst_13 = arith.constant 0.000000e+00 : f32
    %19 = vector.broadcast %cst_13 : f32 to vector<16x128xf32>
    %20 = arith.maximumf %18, %19 : vector<16x128xf32>
    %c1_14 = arith.constant 1 : index
    %c0_15 = arith.constant 0 : index
    %21 = vector.load %arg2[%c1_14, %c0_15] : memref<3x128xf32, #tpu.memory_space<vmem>>, vector<1x128xf32>
    %22 = vector.broadcast %21 : vector<1x128xf32> to vector<16x128xf32>
    %23 = arith.mulf %20, %22 : vector<16x128xf32>
    %c2_16 = arith.constant 2 : index
    %c0_17 = arith.constant 0 : index
    %24 = vector.load %arg2[%c2_16, %c0_17] : memref<3x128xf32, #tpu.memory_space<vmem>>, vector<1x128xf32>
    %25 = vector.broadcast %24 : vector<1x128xf32> to vector<16x128xf32>
    %26 = arith.addf %23, %25 : vector<16x128xf32>
    %27 = vector.extract_strided_slice %26 {offsets = [0, 0], sizes = [16, 64], strides = [1, 1]} : vector<16x128xf32> to vector<16x64xf32>
    %28 = vector.extract_strided_slice %26 {offsets = [0, 64], sizes = [16, 64], strides = [1, 1]} : vector<16x128xf32> to vector<16x64xf32>
    %29 = arith.maximumf %27, %28 : vector<16x64xf32>
    %c0_18 = arith.constant 0 : index
    %c0_19 = arith.constant 0 : index
    %c0_20 = arith.constant 0 : index
    %30 = vector.load %arg3[%c0_18, %c0_19, %c0_20] : memref<2x8x16xf32, #tpu.memory_space<vmem>>, vector<1x8x16xf32>
    %31 = vector.shape_cast %30 : vector<1x8x16xf32> to vector<8x16xf32>
    %cst_21 = arith.constant dense<0.000000e+00> : vector<8x64xf32>
    %32 = tpu.matmul %31, %29, %cst_21 {dimension_numbers = #tpu.dot_dimension_numbers<[1], [0], [0], [1], [0, 0, 1, 1], [], []>} : vector<8x16xf32>, vector<16x64xf32>, vector<8x64xf32> -> vector<8x64xf32>
    %c1_22 = arith.constant 1 : index
    %c0_23 = arith.constant 0 : index
    %c0_24 = arith.constant 0 : index
    %33 = vector.load %arg3[%c1_22, %c0_23, %c0_24] : memref<2x8x16xf32, #tpu.memory_space<vmem>>, vector<1x8x16xf32>
    %34 = vector.shape_cast %33 : vector<1x8x16xf32> to vector<8x16xf32>
    %cst_25 = arith.constant dense<0.000000e+00> : vector<8x64xf32>
    %35 = tpu.matmul %34, %29, %cst_25 {dimension_numbers = #tpu.dot_dimension_numbers<[1], [0], [0], [1], [0, 0, 1, 1], [], []>} : vector<8x16xf32>, vector<16x64xf32>, vector<8x64xf32> -> vector<8x64xf32>
    %36 = arith.maximumf %32, %35 : vector<8x64xf32>
    %cst_26 = arith.constant 0.000000e+00 : f32
    %37 = vector.broadcast %cst_26 : f32 to vector<1x64xf32>
    %c0_27 = arith.constant 0 : index
    %c0_28 = arith.constant 0 : index
    %38 = vector.load %arg12[%c0_27, %c0_28] : memref<10x64xf32, #tpu.memory_space<vmem>>, vector<1x64xf32>
    tpu.vector_store %arg12[%c0_27, %c0_28], %37 {strides = array<i32>} : memref<10x64xf32, #tpu.memory_space<vmem>>, vector<1x64xf32>,
    %c9 = arith.constant 9 : index
    %c0_29 = arith.constant 0 : index
    %39 = vector.load %arg12[%c9, %c0_29] : memref<10x64xf32, #tpu.memory_space<vmem>>, vector<1x64xf32>
    tpu.vector_store %arg12[%c9, %c0_29], %37 {strides = array<i32>} : memref<10x64xf32, #tpu.memory_space<vmem>>, vector<1x64xf32>,
    %c1_30 = arith.constant 1 : index
    %c0_31 = arith.constant 0 : index
    %40 = vector.load %arg12[%c1_30, %c0_31] : memref<10x64xf32, #tpu.memory_space<vmem>>, vector<8x64xf32>
    tpu.vector_store %arg12[%c1_30, %c0_31], %36 {strides = array<i32>} : memref<10x64xf32, #tpu.memory_space<vmem>>, vector<8x64xf32>,
    %c0_32 = arith.constant 0 : index
    %c0_33 = arith.constant 0 : index
    %41 = vector.load %arg12[%c0_32, %c0_33] : memref<10x64xf32, #tpu.memory_space<vmem>>, vector<10x64xf32>
    %42 = vector.extract_strided_slice %41 {offsets = [0, 0], sizes = [8, 64], strides = [1, 1]} : vector<10x64xf32> to vector<8x64xf32>
    %c0_34 = arith.constant 0 : index
    %c0_35 = arith.constant 0 : index
    %c0_36 = arith.constant 0 : index
    %43 = vector.load %arg4[%c0_34, %c0_35, %c0_36] : memref<3x64x128xf32, #tpu.memory_space<vmem>>, vector<1x64x128xf32>
    %44 = vector.shape_cast %43 : vector<1x64x128xf32> to vector<64x128xf32>
    %cst_37 = arith.constant dense<0.000000e+00> : vector<8x128xf32>
    %45 = tpu.matmul %42, %44, %cst_37 {dimension_numbers = #tpu.dot_dimension_numbers<[1], [0], [0], [1], [0, 0, 1, 1], [], []>} : vector<8x64xf32>, vector<64x128xf32>, vector<8x128xf32> -> vector<8x128xf32>
    %46 = vector.extract_strided_slice %41 {offsets = [1, 0], sizes = [8, 64], strides = [1, 1]} : vector<10x64xf32> to vector<8x64xf32>
    %c1_38 = arith.constant 1 : index
    %c0_39 = arith.constant 0 : index
    %c0_40 = arith.constant 0 : index
    %47 = vector.load %arg4[%c1_38, %c0_39, %c0_40] : memref<3x64x128xf32, #tpu.memory_space<vmem>>, vector<1x64x128xf32>
    %48 = vector.shape_cast %47 : vector<1x64x128xf32> to vector<64x128xf32>
    %cst_41 = arith.constant dense<0.000000e+00> : vector<8x128xf32>
    %49 = tpu.matmul %46, %48, %cst_41 {dimension_numbers = #tpu.dot_dimension_numbers<[1], [0], [0], [1], [0, 0, 1, 1], [], []>} : vector<8x64xf32>, vector<64x128xf32>, vector<8x128xf32> -> vector<8x128xf32>
    %50 = arith.addf %45, %49 : vector<8x128xf32>
    %51 = vector.extract_strided_slice %41 {offsets = [2, 0], sizes = [8, 64], strides = [1, 1]} : vector<10x64xf32> to vector<8x64xf32>
    %c2_42 = arith.constant 2 : index
    %c0_43 = arith.constant 0 : index
    %c0_44 = arith.constant 0 : index
    %52 = vector.load %arg4[%c2_42, %c0_43, %c0_44] : memref<3x64x128xf32, #tpu.memory_space<vmem>>, vector<1x64x128xf32>
    %53 = vector.shape_cast %52 : vector<1x64x128xf32> to vector<64x128xf32>
    %cst_45 = arith.constant dense<0.000000e+00> : vector<8x128xf32>
    %54 = tpu.matmul %51, %53, %cst_45 {dimension_numbers = #tpu.dot_dimension_numbers<[1], [0], [0], [1], [0, 0, 1, 1], [], []>} : vector<8x64xf32>, vector<64x128xf32>, vector<8x128xf32> -> vector<8x128xf32>
    %55 = arith.addf %50, %54 : vector<8x128xf32>
    %c0_46 = arith.constant 0 : index
    %c0_47 = arith.constant 0 : index
    %56 = vector.load %arg5[%c0_46, %c0_47] : memref<3x128xf32, #tpu.memory_space<vmem>>, vector<1x128xf32>
    %57 = vector.broadcast %56 : vector<1x128xf32> to vector<8x128xf32>
    %58 = arith.addf %55, %57 : vector<8x128xf32>
    %cst_48 = arith.constant 0.000000e+00 : f32
    %59 = vector.broadcast %cst_48 : f32 to vector<8x128xf32>
    %60 = arith.maximumf %58, %59 : vector<8x128xf32>
    %c1_49 = arith.constant 1 : index
    %c0_50 = arith.constant 0 : index
    %61 = vector.load %arg5[%c1_49, %c0_50] : memref<3x128xf32, #tpu.memory_space<vmem>>, vector<1x128xf32>
    %62 = vector.broadcast %61 : vector<1x128xf32> to vector<8x128xf32>
    %63 = arith.mulf %60, %62 : vector<8x128xf32>
    %c2_51 = arith.constant 2 : index
    %c0_52 = arith.constant 0 : index
    %64 = vector.load %arg5[%c2_51, %c0_52] : memref<3x128xf32, #tpu.memory_space<vmem>>, vector<1x128xf32>
    %65 = vector.broadcast %64 : vector<1x128xf32> to vector<8x128xf32>
    %66 = arith.addf %63, %65 : vector<8x128xf32>
    %67 = vector.extract_strided_slice %66 {offsets = [0, 0], sizes = [8, 64], strides = [1, 1]} : vector<8x128xf32> to vector<8x64xf32>
    %68 = vector.extract_strided_slice %66 {offsets = [0, 64], sizes = [8, 64], strides = [1, 1]} : vector<8x128xf32> to vector<8x64xf32>
    %69 = arith.maximumf %67, %68 : vector<8x64xf32>
    %c0_53 = arith.constant 0 : index
    %c0_54 = arith.constant 0 : index
    %c0_55 = arith.constant 0 : index
    %70 = vector.load %arg6[%c0_53, %c0_54, %c0_55] : memref<2x4x8xf32, #tpu.memory_space<vmem>>, vector<1x4x8xf32>
    %71 = vector.shape_cast %70 : vector<1x4x8xf32> to vector<4x8xf32>
    %cst_56 = arith.constant dense<0.000000e+00> : vector<4x64xf32>
    %72 = tpu.matmul %71, %69, %cst_56 {dimension_numbers = #tpu.dot_dimension_numbers<[1], [0], [0], [1], [0, 0, 1, 1], [], []>} : vector<4x8xf32>, vector<8x64xf32>, vector<4x64xf32> -> vector<4x64xf32>
    %c1_57 = arith.constant 1 : index
    %c0_58 = arith.constant 0 : index
    %c0_59 = arith.constant 0 : index
    %73 = vector.load %arg6[%c1_57, %c0_58, %c0_59] : memref<2x4x8xf32, #tpu.memory_space<vmem>>, vector<1x4x8xf32>
    %74 = vector.shape_cast %73 : vector<1x4x8xf32> to vector<4x8xf32>
    %cst_60 = arith.constant dense<0.000000e+00> : vector<4x64xf32>
    %75 = tpu.matmul %74, %69, %cst_60 {dimension_numbers = #tpu.dot_dimension_numbers<[1], [0], [0], [1], [0, 0, 1, 1], [], []>} : vector<4x8xf32>, vector<8x64xf32>, vector<4x64xf32> -> vector<4x64xf32>
    %76 = arith.maximumf %72, %75 : vector<4x64xf32>
    %77 = vector.extract_strided_slice %76 {offsets = [0, 0], sizes = [1, 64], strides = [1, 1]} : vector<4x64xf32> to vector<1x64xf32>
    %c0_61 = arith.constant 0 : index
    %c0_62 = arith.constant 0 : index
    %78 = vector.load %arg13[%c0_61, %c0_62] : memref<2x256xf32, #tpu.memory_space<vmem>>, vector<1x64xf32>
    tpu.vector_store %arg13[%c0_61, %c0_62], %77 {strides = array<i32>} : memref<2x256xf32, #tpu.memory_space<vmem>>, vector<1x64xf32>,
    %79 = vector.extract_strided_slice %76 {offsets = [1, 0], sizes = [1, 64], strides = [1, 1]} : vector<4x64xf32> to vector<1x64xf32>
    %c0_63 = arith.constant 0 : index
    %c64 = arith.constant 64 : index
    %80 = vector.load %arg13[%c0_63, %c64] : memref<2x256xf32, #tpu.memory_space<vmem>>, vector<1x64xf32>
    tpu.vector_store %arg13[%c0_63, %c64], %79 {strides = array<i32>} : memref<2x256xf32, #tpu.memory_space<vmem>>, vector<1x64xf32>,
    %81 = vector.extract_strided_slice %76 {offsets = [2, 0], sizes = [1, 64], strides = [1, 1]} : vector<4x64xf32> to vector<1x64xf32>
    %c0_64 = arith.constant 0 : index
    %c128 = arith.constant 128 : index
    %82 = vector.load %arg13[%c0_64, %c128] : memref<2x256xf32, #tpu.memory_space<vmem>>, vector<1x64xf32>
    tpu.vector_store %arg13[%c0_64, %c128], %81 {strides = array<i32>} : memref<2x256xf32, #tpu.memory_space<vmem>>, vector<1x64xf32>,
    %83 = vector.extract_strided_slice %76 {offsets = [3, 0], sizes = [1, 64], strides = [1, 1]} : vector<4x64xf32> to vector<1x64xf32>
    %c0_65 = arith.constant 0 : index
    %c192 = arith.constant 192 : index
    %84 = vector.load %arg13[%c0_65, %c192] : memref<2x256xf32, #tpu.memory_space<vmem>>, vector<1x64xf32>
    tpu.vector_store %arg13[%c0_65, %c192], %83 {strides = array<i32>} : memref<2x256xf32, #tpu.memory_space<vmem>>, vector<1x64xf32>,
    %c1_66 = arith.constant 1 : index
    %c0_67 = arith.constant 0 : index
    %c0_68 = arith.constant 0 : index
    %85 = vector.load %arg0[%c1_66, %c0_67, %c0_68] : memref<2x18x64xf32, #tpu.memory_space<vmem>>, vector<1x18x64xf32>
    %86 = vector.shape_cast %85 : vector<1x18x64xf32> to vector<18x64xf32>
    %87 = vector.extract_strided_slice %86 {offsets = [0, 0], sizes = [16, 64], strides = [1, 1]} : vector<18x64xf32> to vector<16x64xf32>
    %c0_69 = arith.constant 0 : index
    %c0_70 = arith.constant 0 : index
    %c0_71 = arith.constant 0 : index
    %88 = vector.load %arg1[%c0_69, %c0_70, %c0_71] : memref<3x64x128xf32, #tpu.memory_space<vmem>>, vector<1x64x128xf32>
    %89 = vector.shape_cast %88 : vector<1x64x128xf32> to vector<64x128xf32>
    %cst_72 = arith.constant dense<0.000000e+00> : vector<16x128xf32>
    %90 = tpu.matmul %87, %89, %cst_72 {dimension_numbers = #tpu.dot_dimension_numbers<[1], [0], [0], [1], [0, 0, 1, 1], [], []>} : vector<16x64xf32>, vector<64x128xf32>, vector<16x128xf32> -> vector<16x128xf32>
    %91 = vector.extract_strided_slice %86 {offsets = [1, 0], sizes = [16, 64], strides = [1, 1]} : vector<18x64xf32> to vector<16x64xf32>
    %c1_73 = arith.constant 1 : index
    %c0_74 = arith.constant 0 : index
    %c0_75 = arith.constant 0 : index
    %92 = vector.load %arg1[%c1_73, %c0_74, %c0_75] : memref<3x64x128xf32, #tpu.memory_space<vmem>>, vector<1x64x128xf32>
    %93 = vector.shape_cast %92 : vector<1x64x128xf32> to vector<64x128xf32>
    %cst_76 = arith.constant dense<0.000000e+00> : vector<16x128xf32>
    %94 = tpu.matmul %91, %93, %cst_76 {dimension_numbers = #tpu.dot_dimension_numbers<[1], [0], [0], [1], [0, 0, 1, 1], [], []>} : vector<16x64xf32>, vector<64x128xf32>, vector<16x128xf32> -> vector<16x128xf32>
    %95 = arith.addf %90, %94 : vector<16x128xf32>
    %96 = vector.extract_strided_slice %86 {offsets = [2, 0], sizes = [16, 64], strides = [1, 1]} : vector<18x64xf32> to vector<16x64xf32>
    %c2_77 = arith.constant 2 : index
    %c0_78 = arith.constant 0 : index
    %c0_79 = arith.constant 0 : index
    %97 = vector.load %arg1[%c2_77, %c0_78, %c0_79] : memref<3x64x128xf32, #tpu.memory_space<vmem>>, vector<1x64x128xf32>
    %98 = vector.shape_cast %97 : vector<1x64x128xf32> to vector<64x128xf32>
    %cst_80 = arith.constant dense<0.000000e+00> : vector<16x128xf32>
    %99 = tpu.matmul %96, %98, %cst_80 {dimension_numbers = #tpu.dot_dimension_numbers<[1], [0], [0], [1], [0, 0, 1, 1], [], []>} : vector<16x64xf32>, vector<64x128xf32>, vector<16x128xf32> -> vector<16x128xf32>
    %100 = arith.addf %95, %99 : vector<16x128xf32>
    %c0_81 = arith.constant 0 : index
    %c0_82 = arith.constant 0 : index
    %101 = vector.load %arg2[%c0_81, %c0_82] : memref<3x128xf32, #tpu.memory_space<vmem>>, vector<1x128xf32>
    %102 = vector.broadcast %101 : vector<1x128xf32> to vector<16x128xf32>
    %103 = arith.addf %100, %102 : vector<16x128xf32>
    %cst_83 = arith.constant 0.000000e+00 : f32
    %104 = vector.broadcast %cst_83 : f32 to vector<16x128xf32>
    %105 = arith.maximumf %103, %104 : vector<16x128xf32>
    %c1_84 = arith.constant 1 : index
    %c0_85 = arith.constant 0 : index
    %106 = vector.load %arg2[%c1_84, %c0_85] : memref<3x128xf32, #tpu.memory_space<vmem>>, vector<1x128xf32>
    %107 = vector.broadcast %106 : vector<1x128xf32> to vector<16x128xf32>
    %108 = arith.mulf %105, %107 : vector<16x128xf32>
    %c2_86 = arith.constant 2 : index
    %c0_87 = arith.constant 0 : index
    %109 = vector.load %arg2[%c2_86, %c0_87] : memref<3x128xf32, #tpu.memory_space<vmem>>, vector<1x128xf32>
    %110 = vector.broadcast %109 : vector<1x128xf32> to vector<16x128xf32>
    %111 = arith.addf %108, %110 : vector<16x128xf32>
    %112 = vector.extract_strided_slice %111 {offsets = [0, 0], sizes = [16, 64], strides = [1, 1]} : vector<16x128xf32> to vector<16x64xf32>
    %113 = vector.extract_strided_slice %111 {offsets = [0, 64], sizes = [16, 64], strides = [1, 1]} : vector<16x128xf32> to vector<16x64xf32>
    %114 = arith.maximumf %112, %113 : vector<16x64xf32>
    %c0_88 = arith.constant 0 : index
    %c0_89 = arith.constant 0 : index
    %c0_90 = arith.constant 0 : index
    %115 = vector.load %arg3[%c0_88, %c0_89, %c0_90] : memref<2x8x16xf32, #tpu.memory_space<vmem>>, vector<1x8x16xf32>
    %116 = vector.shape_cast %115 : vector<1x8x16xf32> to vector<8x16xf32>
    %cst_91 = arith.constant dense<0.000000e+00> : vector<8x64xf32>
    %117 = tpu.matmul %116, %114, %cst_91 {dimension_numbers = #tpu.dot_dimension_numbers<[1], [0], [0], [1], [0, 0, 1, 1], [], []>} : vector<8x16xf32>, vector<16x64xf32>, vector<8x64xf32> -> vector<8x64xf32>
    %c1_92 = arith.constant 1 : index
    %c0_93 = arith.constant 0 : index
    %c0_94 = arith.constant 0 : index
    %118 = vector.load %arg3[%c1_92, %c0_93, %c0_94] : memref<2x8x16xf32, #tpu.memory_space<vmem>>, vector<1x8x16xf32>
    %119 = vector.shape_cast %118 : vector<1x8x16xf32> to vector<8x16xf32>
    %cst_95 = arith.constant dense<0.000000e+00> : vector<8x64xf32>
    %120 = tpu.matmul %119, %114, %cst_95 {dimension_numbers = #tpu.dot_dimension_numbers<[1], [0], [0], [1], [0, 0, 1, 1], [], []>} : vector<8x16xf32>, vector<16x64xf32>, vector<8x64xf32> -> vector<8x64xf32>
    %121 = arith.maximumf %117, %120 : vector<8x64xf32>
    %cst_96 = arith.constant 0.000000e+00 : f32
    %122 = vector.broadcast %cst_96 : f32 to vector<1x64xf32>
    %c0_97 = arith.constant 0 : index
    %c0_98 = arith.constant 0 : index
    %123 = vector.load %arg12[%c0_97, %c0_98] : memref<10x64xf32, #tpu.memory_space<vmem>>, vector<1x64xf32>
    tpu.vector_store %arg12[%c0_97, %c0_98], %122 {strides = array<i32>} : memref<10x64xf32, #tpu.memory_space<vmem>>, vector<1x64xf32>,
    %c9_99 = arith.constant 9 : index
    %c0_100 = arith.constant 0 : index
    %124 = vector.load %arg12[%c9_99, %c0_100] : memref<10x64xf32, #tpu.memory_space<vmem>>, vector<1x64xf32>
    tpu.vector_store %arg12[%c9_99, %c0_100], %122 {strides = array<i32>} : memref<10x64xf32, #tpu.memory_space<vmem>>, vector<1x64xf32>,
    %c1_101 = arith.constant 1 : index
    %c0_102 = arith.constant 0 : index
    %125 = vector.load %arg12[%c1_101, %c0_102] : memref<10x64xf32, #tpu.memory_space<vmem>>, vector<8x64xf32>
    tpu.vector_store %arg12[%c1_101, %c0_102], %121 {strides = array<i32>} : memref<10x64xf32, #tpu.memory_space<vmem>>, vector<8x64xf32>,
    %c0_103 = arith.constant 0 : index
    %c0_104 = arith.constant 0 : index
    %126 = vector.load %arg12[%c0_103, %c0_104] : memref<10x64xf32, #tpu.memory_space<vmem>>, vector<10x64xf32>
    %127 = vector.extract_strided_slice %126 {offsets = [0, 0], sizes = [8, 64], strides = [1, 1]} : vector<10x64xf32> to vector<8x64xf32>
    %c0_105 = arith.constant 0 : index
    %c0_106 = arith.constant 0 : index
    %c0_107 = arith.constant 0 : index
    %128 = vector.load %arg4[%c0_105, %c0_106, %c0_107] : memref<3x64x128xf32, #tpu.memory_space<vmem>>, vector<1x64x128xf32>
    %129 = vector.shape_cast %128 : vector<1x64x128xf32> to vector<64x128xf32>
    %cst_108 = arith.constant dense<0.000000e+00> : vector<8x128xf32>
    %130 = tpu.matmul %127, %129, %cst_108 {dimension_numbers = #tpu.dot_dimension_numbers<[1], [0], [0], [1], [0, 0, 1, 1], [], []>} : vector<8x64xf32>, vector<64x128xf32>, vector<8x128xf32> -> vector<8x128xf32>
    %131 = vector.extract_strided_slice %126 {offsets = [1, 0], sizes = [8, 64], strides = [1, 1]} : vector<10x64xf32> to vector<8x64xf32>
    %c1_109 = arith.constant 1 : index
    %c0_110 = arith.constant 0 : index
    %c0_111 = arith.constant 0 : index
    %132 = vector.load %arg4[%c1_109, %c0_110, %c0_111] : memref<3x64x128xf32, #tpu.memory_space<vmem>>, vector<1x64x128xf32>
    %133 = vector.shape_cast %132 : vector<1x64x128xf32> to vector<64x128xf32>
    %cst_112 = arith.constant dense<0.000000e+00> : vector<8x128xf32>
    %134 = tpu.matmul %131, %133, %cst_112 {dimension_numbers = #tpu.dot_dimension_numbers<[1], [0], [0], [1], [0, 0, 1, 1], [], []>} : vector<8x64xf32>, vector<64x128xf32>, vector<8x128xf32> -> vector<8x128xf32>
    %135 = arith.addf %130, %134 : vector<8x128xf32>
    %136 = vector.extract_strided_slice %126 {offsets = [2, 0], sizes = [8, 64], strides = [1, 1]} : vector<10x64xf32> to vector<8x64xf32>
    %c2_113 = arith.constant 2 : index
    %c0_114 = arith.constant 0 : index
    %c0_115 = arith.constant 0 : index
    %137 = vector.load %arg4[%c2_113, %c0_114, %c0_115] : memref<3x64x128xf32, #tpu.memory_space<vmem>>, vector<1x64x128xf32>
    %138 = vector.shape_cast %137 : vector<1x64x128xf32> to vector<64x128xf32>
    %cst_116 = arith.constant dense<0.000000e+00> : vector<8x128xf32>
    %139 = tpu.matmul %136, %138, %cst_116 {dimension_numbers = #tpu.dot_dimension_numbers<[1], [0], [0], [1], [0, 0, 1, 1], [], []>} : vector<8x64xf32>, vector<64x128xf32>, vector<8x128xf32> -> vector<8x128xf32>
    %140 = arith.addf %135, %139 : vector<8x128xf32>
    %c0_117 = arith.constant 0 : index
    %c0_118 = arith.constant 0 : index
    %141 = vector.load %arg5[%c0_117, %c0_118] : memref<3x128xf32, #tpu.memory_space<vmem>>, vector<1x128xf32>
    %142 = vector.broadcast %141 : vector<1x128xf32> to vector<8x128xf32>
    %143 = arith.addf %140, %142 : vector<8x128xf32>
    %cst_119 = arith.constant 0.000000e+00 : f32
    %144 = vector.broadcast %cst_119 : f32 to vector<8x128xf32>
    %145 = arith.maximumf %143, %144 : vector<8x128xf32>
    %c1_120 = arith.constant 1 : index
    %c0_121 = arith.constant 0 : index
    %146 = vector.load %arg5[%c1_120, %c0_121] : memref<3x128xf32, #tpu.memory_space<vmem>>, vector<1x128xf32>
    %147 = vector.broadcast %146 : vector<1x128xf32> to vector<8x128xf32>
    %148 = arith.mulf %145, %147 : vector<8x128xf32>
    %c2_122 = arith.constant 2 : index
    %c0_123 = arith.constant 0 : index
    %149 = vector.load %arg5[%c2_122, %c0_123] : memref<3x128xf32, #tpu.memory_space<vmem>>, vector<1x128xf32>
    %150 = vector.broadcast %149 : vector<1x128xf32> to vector<8x128xf32>
    %151 = arith.addf %148, %150 : vector<8x128xf32>
    %152 = vector.extract_strided_slice %151 {offsets = [0, 0], sizes = [8, 64], strides = [1, 1]} : vector<8x128xf32> to vector<8x64xf32>
    %153 = vector.extract_strided_slice %151 {offsets = [0, 64], sizes = [8, 64], strides = [1, 1]} : vector<8x128xf32> to vector<8x64xf32>
    %154 = arith.maximumf %152, %153 : vector<8x64xf32>
    %c0_124 = arith.constant 0 : index
    %c0_125 = arith.constant 0 : index
    %c0_126 = arith.constant 0 : index
    %155 = vector.load %arg6[%c0_124, %c0_125, %c0_126] : memref<2x4x8xf32, #tpu.memory_space<vmem>>, vector<1x4x8xf32>
    %156 = vector.shape_cast %155 : vector<1x4x8xf32> to vector<4x8xf32>
    %cst_127 = arith.constant dense<0.000000e+00> : vector<4x64xf32>
    %157 = tpu.matmul %156, %154, %cst_127 {dimension_numbers = #tpu.dot_dimension_numbers<[1], [0], [0], [1], [0, 0, 1, 1], [], []>} : vector<4x8xf32>, vector<8x64xf32>, vector<4x64xf32> -> vector<4x64xf32>
    %c1_128 = arith.constant 1 : index
    %c0_129 = arith.constant 0 : index
    %c0_130 = arith.constant 0 : index
    %158 = vector.load %arg6[%c1_128, %c0_129, %c0_130] : memref<2x4x8xf32, #tpu.memory_space<vmem>>, vector<1x4x8xf32>
    %159 = vector.shape_cast %158 : vector<1x4x8xf32> to vector<4x8xf32>
    %cst_131 = arith.constant dense<0.000000e+00> : vector<4x64xf32>
    %160 = tpu.matmul %159, %154, %cst_131 {dimension_numbers = #tpu.dot_dimension_numbers<[1], [0], [0], [1], [0, 0, 1, 1], [], []>} : vector<4x8xf32>, vector<8x64xf32>, vector<4x64xf32> -> vector<4x64xf32>
    %161 = arith.maximumf %157, %160 : vector<4x64xf32>
    %162 = vector.extract_strided_slice %161 {offsets = [0, 0], sizes = [1, 64], strides = [1, 1]} : vector<4x64xf32> to vector<1x64xf32>
    %c1_132 = arith.constant 1 : index
    %c0_133 = arith.constant 0 : index
    %163 = vector.load %arg13[%c1_132, %c0_133] : memref<2x256xf32, #tpu.memory_space<vmem>>, vector<1x64xf32>
    tpu.vector_store %arg13[%c1_132, %c0_133], %162 {strides = array<i32>} : memref<2x256xf32, #tpu.memory_space<vmem>>, vector<1x64xf32>,
    %164 = vector.extract_strided_slice %161 {offsets = [1, 0], sizes = [1, 64], strides = [1, 1]} : vector<4x64xf32> to vector<1x64xf32>
    %c1_134 = arith.constant 1 : index
    %c64_135 = arith.constant 64 : index
    %165 = vector.load %arg13[%c1_134, %c64_135] : memref<2x256xf32, #tpu.memory_space<vmem>>, vector<1x64xf32>
    tpu.vector_store %arg13[%c1_134, %c64_135], %164 {strides = array<i32>} : memref<2x256xf32, #tpu.memory_space<vmem>>, vector<1x64xf32>,
    %166 = vector.extract_strided_slice %161 {offsets = [2, 0], sizes = [1, 64], strides = [1, 1]} : vector<4x64xf32> to vector<1x64xf32>
    %c1_136 = arith.constant 1 : index
    %c128_137 = arith.constant 128 : index
    %167 = vector.load %arg13[%c1_136, %c128_137] : memref<2x256xf32, #tpu.memory_space<vmem>>, vector<1x64xf32>
    tpu.vector_store %arg13[%c1_136, %c128_137], %166 {strides = array<i32>} : memref<2x256xf32, #tpu.memory_space<vmem>>, vector<1x64xf32>,
    %168 = vector.extract_strided_slice %161 {offsets = [3, 0], sizes = [1, 64], strides = [1, 1]} : vector<4x64xf32> to vector<1x64xf32>
    %c1_138 = arith.constant 1 : index
    %c192_139 = arith.constant 192 : index
    %169 = vector.load %arg13[%c1_138, %c192_139] : memref<2x256xf32, #tpu.memory_space<vmem>>, vector<1x64xf32>
    tpu.vector_store %arg13[%c1_138, %c192_139], %168 {strides = array<i32>} : memref<2x256xf32, #tpu.memory_space<vmem>>, vector<1x64xf32>,
    %c0_140 = arith.constant 0 : index
    %c0_141 = arith.constant 0 : index
    %170 = vector.load %arg13[%c0_140, %c0_141] : memref<2x256xf32, #tpu.memory_space<vmem>>, vector<2x256xf32>
    %c0_142 = arith.constant 0 : index
    %c0_143 = arith.constant 0 : index
    %171 = vector.load %arg7[%c0_142, %c0_143] : memref<256x32xf32, #tpu.memory_space<vmem>>, vector<256x32xf32>
    %cst_144 = arith.constant dense<0.000000e+00> : vector<2x32xf32>
    %172 = tpu.matmul %170, %171, %cst_144 {dimension_numbers = #tpu.dot_dimension_numbers<[1], [0], [0], [1], [0, 0, 1, 1], [], []>} : vector<2x256xf32>, vector<256x32xf32>, vector<2x32xf32> -> vector<2x32xf32>
    %c0_145 = arith.constant 0 : index
    %c0_146 = arith.constant 0 : index
    %173 = vector.load %arg8[%c0_145, %c0_146] : memref<1x32xf32, #tpu.memory_space<vmem>>, vector<1x32xf32>
    %174 = vector.broadcast %173 : vector<1x32xf32> to vector<2x32xf32>
    %175 = arith.addf %172, %174 : vector<2x32xf32>
    %cst_147 = arith.constant 0.000000e+00 : f32
    %176 = vector.broadcast %cst_147 : f32 to vector<2x32xf32>
    %177 = arith.maximumf %175, %176 : vector<2x32xf32>
    %c0_148 = arith.constant 0 : index
    %c0_149 = arith.constant 0 : index
    %178 = vector.load %arg9[%c0_148, %c0_149] : memref<32x10xf32, #tpu.memory_space<vmem>>, vector<32x10xf32>
    %cst_150 = arith.constant dense<0.000000e+00> : vector<2x10xf32>
    %179 = tpu.matmul %177, %178, %cst_150 {dimension_numbers = #tpu.dot_dimension_numbers<[1], [0], [0], [1], [0, 0, 1, 1], [], []>} : vector<2x32xf32>, vector<32x10xf32>, vector<2x10xf32> -> vector<2x10xf32>
    %c0_151 = arith.constant 0 : index
    %c0_152 = arith.constant 0 : index
    %180 = vector.load %arg10[%c0_151, %c0_152] : memref<1x10xf32, #tpu.memory_space<vmem>>, vector<1x10xf32>
    %181 = vector.broadcast %180 : vector<1x10xf32> to vector<2x10xf32>
    %182 = arith.addf %179, %181 : vector<2x10xf32>
    %c0_153 = arith.constant 0 : index
    %c0_154 = arith.constant 0 : index
    %183 = vector.load %arg11[%c0_153, %c0_154] : memref<2x10xf32, #tpu.memory_space<vmem>>, vector<2x10xf32>
    tpu.vector_store %arg11[%c0_153, %c0_154], %182 {strides = array<i32>} : memref<2x10xf32, #tpu.memory_space<vmem>>, vector<2x10xf32>,
    return
  }
}

</mosaic_0001>

<llo_original>
// kernel: customized_cnn_forward.1
$region0: #{customized_cnn_forward.1}
  #allocation0 [shape = 'u32[]', space=smem, size = 0x4, offset = 0x4, fixed_abs, tag = 'smem constant byte address 0x4 - core index']
  #allocation1 [shape = 'u32[144,128]{1,0:T(1,128)}', space=vmem, size = 0x12000, scoped, tag = 'internal scratch']
  #allocation2 [shape = 'f32[10,64]{1,0:T(8,128)}', space=vmem, size = 0x2000, scoped, tag = 'scratch operand']
  #allocation3 [shape = 'f32[2,256]{1,0:T(2,128)}', space=vmem, size = 0x800, scoped, tag = 'scratch operand']
  %s0 = inlined_call_operand.vmem [shape: f32[2,18,64], index: 0, kind: input, shape index: {}]
  %s1 = inlined_call_operand.vmem [shape: f32[3,64,128], index: 1, kind: input, shape index: {}]
  %s2 = inlined_call_operand.vmem [shape: f32[3,128], index: 2, kind: input, shape index: {}]
  %s3 = inlined_call_operand.vmem [shape: f32[2,8,16], index: 3, kind: input, shape index: {}]
  %s4 = inlined_call_operand.vmem [shape: f32[3,64,128], index: 4, kind: input, shape index: {}]
  %s5 = inlined_call_operand.vmem [shape: f32[3,128], index: 5, kind: input, shape index: {}]
  %s6 = inlined_call_operand.vmem [shape: f32[2,4,8], index: 6, kind: input, shape index: {}]
  %s7 = inlined_call_operand.vmem [shape: f32[256,32], index: 7, kind: input, shape index: {}]
  %s8 = inlined_call_operand.vmem [shape: f32[1,32], index: 8, kind: input, shape index: {}]
  %s9 = inlined_call_operand.vmem [shape: f32[32,10], index: 9, kind: input, shape index: {}]
  %s10 = inlined_call_operand.vmem [shape: f32[1,10], index: 10, kind: input, shape index: {}]
  %s11 = inlined_call_operand.hbm [shape: f32[2,10], index: 11, kind: output, shape index: {}]
  %s12 = sld [smem:[#allocation0]]
  $region54: #{customized_cnn_forward.1} parent=0
    _
  %s14 = ssub.s32 1, %s12
  %s15 = scalar_select 0, %s14, %s12
  $region1: #{customized_cnn_forward.1} parent=0
    #allocation4 [shape = 'u8[1024]{0}', space=vmem, size = 0x400, scoped, tag = 'output window, operand 0, single buffered']
    #allocation5 [shape = 's32[1]{0}', space=sflag, size = 0x4, scoped, tag = 'scoped memory for customized_cnn_forward.1']
    %16 = vsyncpa [#allocation5], 0
    // Predicated region
    $region2: #{customized_cnn_forward.1} parent=1 // pred_check
      _
    $region3: #{customized_cnn_forward.1} parent=1 // pred_check_branch
      %18 = sbr.rel (0) target = $region5
    $region4: #{customized_cnn_forward.1} parent=1 // pred_region
      _
    $region5: #{customized_cnn_forward.1} parent=1 // pred_fallthru
      _
    // Predicated region
    $region6: #{customized_cnn_forward.1} parent=1 // pred_check
      _
    $region7: #{customized_cnn_forward.1} parent=1 // pred_check_branch
      %20 = sbr.rel (0) target = $region9
    $region8: #{customized_cnn_forward.1} parent=1 // pred_region
      _
    $region9: #{customized_cnn_forward.1} parent=1 // pred_fallthru
      _
    // Predicated region
    $region10: #{customized_cnn_forward.1} parent=1 // pred_check
      _
    $region11: #{customized_cnn_forward.1} parent=1 // pred_check_branch
      %22 = sbr.rel (0) target = $region13
    $region12: #{customized_cnn_forward.1} parent=1 // pred_region
      _
    $region13: #{customized_cnn_forward.1} parent=1 // pred_fallthru
      _
    // Predicated region
    $region14: #{customized_cnn_forward.1} parent=1 // pred_check
      _
    $region15: #{customized_cnn_forward.1} parent=1 // pred_check_branch
      %24 = sbr.rel (0) target = $region17
    $region16: #{customized_cnn_forward.1} parent=1 // pred_region
      _
    $region17: #{customized_cnn_forward.1} parent=1 // pred_fallthru
      _
    // Predicated region
    $region18: #{customized_cnn_forward.1} parent=1 // pred_check
      _
    $region19: #{customized_cnn_forward.1} parent=1 // pred_check_branch
      %26 = sbr.rel (0) target = $region21
    $region20: #{customized_cnn_forward.1} parent=1 // pred_region
      _
    $region21: #{customized_cnn_forward.1} parent=1 // pred_fallthru
      _
    // Predicated region
    $region22: #{customized_cnn_forward.1} parent=1 // pred_check
      _
    $region23: #{customized_cnn_forward.1} parent=1 // pred_check_branch
      %28 = sbr.rel (0) target = $region25
    $region24: #{customized_cnn_forward.1} parent=1 // pred_region
      _
    $region25: #{customized_cnn_forward.1} parent=1 // pred_fallthru
      _
    // Predicated region
    $region26: #{customized_cnn_forward.1} parent=1 // pred_check
      _
    $region27: #{customized_cnn_forward.1} parent=1 // pred_check_branch
      %30 = sbr.rel (0) target = $region29
    $region28: #{customized_cnn_forward.1} parent=1 // pred_region
      _
    $region29: #{customized_cnn_forward.1} parent=1 // pred_fallthru
      _
    // Predicated region
    $region30: #{customized_cnn_forward.1} parent=1 // pred_check
      _
    $region31: #{customized_cnn_forward.1} parent=1 // pred_check_branch
      %32 = sbr.rel (0) target = $region33
    $region32: #{customized_cnn_forward.1} parent=1 // pred_region
      _
    $region33: #{customized_cnn_forward.1} parent=1 // pred_fallthru
      _
    // Predicated region
    $region34: #{customized_cnn_forward.1} parent=1 // pred_check
      _
    $region35: #{customized_cnn_forward.1} parent=1 // pred_check_branch
      %34 = sbr.rel (0) target = $region37
    $region36: #{customized_cnn_forward.1} parent=1 // pred_region
      _
    $region37: #{customized_cnn_forward.1} parent=1 // pred_fallthru
      _
    // Predicated region
    $region38: #{customized_cnn_forward.1} parent=1 // pred_check
      _
    $region39: #{customized_cnn_forward.1} parent=1 // pred_check_branch
      %36 = sbr.rel (0) target = $region41
    $region40: #{customized_cnn_forward.1} parent=1 // pred_region
      _
    $region41: #{customized_cnn_forward.1} parent=1 // pred_fallthru
      _
    // Predicated region
    $region42: #{customized_cnn_forward.1} parent=1 // pred_check
      _
    $region43: #{customized_cnn_forward.1} parent=1 // pred_check_branch
      %38 = sbr.rel (0) target = $region45
    $region44: #{customized_cnn_forward.1} parent=1 // pred_region
      _
    $region45: #{customized_cnn_forward.1} parent=1 // pred_fallthru
      _
    %v39 = vld [vmem:[%s0] sm:$0xff]
    %v40 = vld [vmem:[%s0 + $0x8] sm:$0xff]
    %v41 = vld [vmem:[%s0 + $0x10] sm:$0x3]
    %v42 = vld [vmem:[%s1] sm:$0xff]
    %v43 = vld [vmem:[%s1 + $0x8] sm:$0xff]
    %v44 = vld [vmem:[%s1 + $0x10] sm:$0xff]
    %v45 = vld [vmem:[%s1 + $0x18] sm:$0xff]
    %v46 = vld [vmem:[%s1 + $0x20] sm:$0xff]
    %v47 = vld [vmem:[%s1 + $0x28] sm:$0xff]
    %v48 = vld [vmem:[%s1 + $0x30] sm:$0xff]
    %v49 = vld [vmem:[%s1 + $0x38] sm:$0xff]
    %s50 = scalar_lea.vmem %s1, 64
    %v51 = vld [vmem:[%s50] sm:$0xff]
    %v52 = vld [vmem:[%s50 + $0x8] sm:$0xff]
    %v53 = vld [vmem:[%s50 + $0x10] sm:$0xff]
    %v54 = vld [vmem:[%s50 + $0x18] sm:$0xff]
    %v55 = vld [vmem:[%s50 + $0x20] sm:$0xff]
    %v56 = vld [vmem:[%s50 + $0x28] sm:$0xff]
    %v57 = vld [vmem:[%s50 + $0x30] sm:$0xff]
    %v58 = vld [vmem:[%s50 + $0x38] sm:$0xff]
    %vm62 = vcmask 1046528
    %v63 = vrot.slane %v39, 1
    %v64 = vrot.slane %v40, 1
    %v65 = vsel %vm62, %v63, %v64
    %v66 = vrot.slane %v41, 1
    %v67 = vsel %vm62, %v64, %v66
    %vm68 = vcmask 523264
    %v69 = vsel %vm68, %v65, 0
    %v71 = vsel %vm68, %v67, 0
    %73 = vmatprep.subr.mxu0 0.0
    %74 = vmatpush1.msra.mxu0 0.0
    %75 = vmatprep.subr.mxu0 0.0
    %76 = vmatpush1.msra.mxu0 0.0
    %77 = vmatprep.subr.mxu0 0.0
    %78 = vmatpush1.msra.mxu0 0.0
    %79 = vmatprep.subr.mxu0 0.0
    %80 = vmatpush1.msra.mxu0 0.0
    %81 = vmatprep.subr.mxu0 0.0
    %82 = vmatpush1.msra.mxu0 0.0
    %83 = vmatprep.subr.mxu0 0.0
    %84 = vmatpush1.msra.mxu0 0.0
    %85 = vmatprep.subr.mxu0 0.0
    %86 = vmatpush1.msra.mxu0 0.0
    %87 = vmatprep.subr.mxu0 0.0
    %88 = vmatpush1.msra.mxu0 0.0
    %89 = vmatprep.subr.mxu0 0.0
    %90 = vmatpush1.msra.mxu0 %v58
    %91 = vmatprep.subr.mxu0 0.0
    %92 = vmatpush1.msra.mxu0 %v57
    %93 = vmatprep.subr.mxu0 0.0
    %94 = vmatpush1.msra.mxu0 %v56
    %95 = vmatprep.subr.mxu0 0.0
    %96 = vmatpush1.msra.mxu0 %v55
    %97 = vmatprep.subr.mxu0 0.0
    %98 = vmatpush1.msra.mxu0 %v54
    %99 = vmatprep.subr.mxu0 0.0
    %100 = vmatpush1.msra.mxu0 %v53
    %101 = vmatprep.subr.mxu0 0.0
    %102 = vmatpush1.msra.mxu0 %v52
    %103 = vmatprep.subr.mxu0 0.0
    %104 = vmatpush1.msra.mxu0 %v51
    %105 = vmatprep.subr.mxu0 0.0
    %106 = vmatpush2.msra.mxu0 0.0
    %107 = vmatprep.subr.mxu0 0.0
    %108 = vmatpush2.msra.mxu0 0.0
    %109 = vmatprep.subr.mxu0 0.0
    %110 = vmatpush2.msra.mxu0 0.0
    %111 = vmatprep.subr.mxu0 0.0
    %112 = vmatpush2.msra.mxu0 0.0
    %113 = vmatprep.subr.mxu0 0.0
    %114 = vmatpush2.msra.mxu0 0.0
    %115 = vmatprep.subr.mxu0 0.0
    %116 = vmatpush2.msra.mxu0 0.0
    %117 = vmatprep.subr.mxu0 0.0
    %118 = vmatpush2.msra.mxu0 0.0
    %119 = vmatprep.subr.mxu0 0.0
    %120 = vmatpush2.msra.mxu0 0.0
    %121 = vmatprep.subr.mxu0 0.0
    %122 = vmatpush2.msra.mxu0 0.0
    %123 = vmatprep.subr.mxu0 0.0
    %124 = vmatpush2.msra.mxu0 0.0
    %125 = vmatprep.subr.mxu0 0.0
    %126 = vmatpush2.msra.mxu0 0.0
    %127 = vmatprep.subr.mxu0 0.0
    %128 = vmatpush2.msra.mxu0 0.0
    %129 = vmatprep.subr.mxu0 0.0
    %130 = vmatpush2.msra.mxu0 0.0
    %131 = vmatprep.subr.mxu0 0.0
    %132 = vmatpush2.msra.mxu0 0.0
    %133 = vmatprep.subr.mxu0 0.0
    %134 = vmatpush2.msra.mxu0 0.0
    %135 = vmatprep.subr.mxu0 0.0
    %136 = vmatpush2.msra.mxu0 0.0
    %137 = vmatprep.mubr.f32.mxu0 0.0
    %138 = vmatmul.mubr.f32.gmra.mxu0 %v69
    %v139 = vpop.f32.mrf.mxu0
    %v140 = vadd.f32 0.0, %v139
    %v141 = vpop.f32.mrf.mxu0
    %142 = vmatprep.mubr.f32.mxu0 0.0
    %143 = vmatmul.mubr.f32.gmra.mxu0 %v71
    %v144 = vpop.f32.mrf.mxu0
    %v145 = vadd.f32 0.0, %v144
    %v146 = vpop.f32.mrf.mxu0
    %147 = vdwg.mxu0
    %v148 = vsel %vm68, %v39, 0
    %v150 = vsel %vm68, %v40, 0
    %152 = vmatprep.subr.mxu0 0.0
    %153 = vmatpush1.msra.mxu0 0.0
    %154 = vmatprep.subr.mxu0 0.0
    %155 = vmatpush1.msra.mxu0 0.0
    %156 = vmatprep.subr.mxu0 0.0
    %157 = vmatpush1.msra.mxu0 0.0
    %158 = vmatprep.subr.mxu0 0.0
    %159 = vmatpush1.msra.mxu0 0.0
    %160 = vmatprep.subr.mxu0 0.0
    %161 = vmatpush1.msra.mxu0 0.0
    %162 = vmatprep.subr.mxu0 0.0
    %163 = vmatpush1.msra.mxu0 0.0
    %164 = vmatprep.subr.mxu0 0.0
    %165 = vmatpush1.msra.mxu0 0.0
    %166 = vmatprep.subr.mxu0 0.0
    %167 = vmatpush1.msra.mxu0 0.0
    %168 = vmatprep.subr.mxu0 0.0
    %169 = vmatpush1.msra.mxu0 %v49
    %170 = vmatprep.subr.mxu0 0.0
    %171 = vmatpush1.msra.mxu0 %v48
    %172 = vmatprep.subr.mxu0 0.0
    %173 = vmatpush1.msra.mxu0 %v47
    %174 = vmatprep.subr.mxu0 0.0
    %175 = vmatpush1.msra.mxu0 %v46
    %176 = vmatprep.subr.mxu0 0.0
    %177 = vmatpush1.msra.mxu0 %v45
    %178 = vmatprep.subr.mxu0 0.0
    %179 = vmatpush1.msra.mxu0 %v44
    %180 = vmatprep.subr.mxu0 0.0
    %181 = vmatpush1.msra.mxu0 %v43
    %182 = vmatprep.subr.mxu0 0.0
    %183 = vmatpush1.msra.mxu0 %v42
    %184 = vmatprep.subr.mxu0 0.0
    %185 = vmatpush2.msra.mxu0 0.0
    %186 = vmatprep.subr.mxu0 0.0
    %187 = vmatpush2.msra.mxu0 0.0
    %188 = vmatprep.subr.mxu0 0.0
    %189 = vmatpush2.msra.mxu0 0.0
    %190 = vmatprep.subr.mxu0 0.0
    %191 = vmatpush2.msra.mxu0 0.0
    %192 = vmatprep.subr.mxu0 0.0
    %193 = vmatpush2.msra.mxu0 0.0
    %194 = vmatprep.subr.mxu0 0.0
    %195 = vmatpush2.msra.mxu0 0.0
    %196 = vmatprep.subr.mxu0 0.0
    %197 = vmatpush2.msra.mxu0 0.0
    %198 = vmatprep.subr.mxu0 0.0
    %199 = vmatpush2.msra.mxu0 0.0
    %200 = vmatprep.subr.mxu0 0.0
    %201 = vmatpush2.msra.mxu0 0.0
    %202 = vmatprep.subr.mxu0 0.0
    %203 = vmatpush2.msra.mxu0 0.0
    %204 = vmatprep.subr.mxu0 0.0
    %205 = vmatpush2.msra.mxu0 0.0
    %206 = vmatprep.subr.mxu0 0.0
    %207 = vmatpush2.msra.mxu0 0.0
    %208 = vmatprep.subr.mxu0 0.0
    %209 = vmatpush2.msra.mxu0 0.0
    %210 = vmatprep.subr.mxu0 0.0
    %211 = vmatpush2.msra.mxu0 0.0
    %212 = vmatprep.subr.mxu0 0.0
    %213 = vmatpush2.msra.mxu0 0.0
    %214 = vmatprep.subr.mxu0 0.0
    %215 = vmatpush2.msra.mxu0 0.0
    %216 = vmatprep.mubr.f32.mxu0 0.0
    %217 = vmatmul.mubr.f32.gmra.mxu0 %v148
    %v218 = vpop.f32.mrf.mxu0
    %v219 = vadd.f32 %v140, %v218
    %v220 = vpop.f32.mrf.mxu0
    %221 = vmatprep.mubr.f32.mxu0 0.0
    %222 = vmatmul.mubr.f32.gmra.mxu0 %v150
    %v223 = vpop.f32.mrf.mxu0
    %v224 = vadd.f32 %v145, %v223
    %v225 = vpop.f32.mrf.mxu0
    %226 = vdwg.mxu0
    %s227 = scalar_lea.vmem %s1, 128
    %v228 = vld [vmem:[%s227] sm:$0xff]
    %v229 = vld [vmem:[%s227 + $0x8] sm:$0xff]
    %v230 = vld [vmem:[%s227 + $0x10] sm:$0xff]
    %v231 = vld [vmem:[%s227 + $0x18] sm:$0xff]
    %v232 = vld [vmem:[%s227 + $0x20] sm:$0xff]
    %v233 = vld [vmem:[%s227 + $0x28] sm:$0xff]
    %v234 = vld [vmem:[%s227 + $0x30] sm:$0xff]
    %v235 = vld [vmem:[%s227 + $0x38] sm:$0xff]
    %vm236 = vcmask 1045504
    %v237 = vrot.slane %v39, 2
    %v238 = vrot.slane %v40, 2
    %v239 = vsel %vm236, %v237, %v238
    %v240 = vrot.slane %v41, 2
    %v241 = vsel %vm236, %v238, %v240
    %v242 = vsel %vm68, %v239, 0
    %v244 = vsel %vm68, %v241, 0
    %246 = vmatprep.subr.mxu0 0.0
    %247 = vmatpush1.msra.mxu0 0.0
    %248 = vmatprep.subr.mxu0 0.0
    %249 = vmatpush1.msra.mxu0 0.0
    %250 = vmatprep.subr.mxu0 0.0
    %251 = vmatpush1.msra.mxu0 0.0
    %252 = vmatprep.subr.mxu0 0.0
    %253 = vmatpush1.msra.mxu0 0.0
    %254 = vmatprep.subr.mxu0 0.0
    %255 = vmatpush1.msra.mxu0 0.0
    %256 = vmatprep.subr.mxu0 0.0
    %257 = vmatpush1.msra.mxu0 0.0
    %258 = vmatprep.subr.mxu0 0.0
    %259 = vmatpush1.msra.mxu0 0.0
    %260 = vmatprep.subr.mxu0 0.0
    %261 = vmatpush1.msra.mxu0 0.0
    %262 = vmatprep.subr.mxu0 0.0
    %263 = vmatpush1.msra.mxu0 %v235
    %264 = vmatprep.subr.mxu0 0.0
    %265 = vmatpush1.msra.mxu0 %v234
    %266 = vmatprep.subr.mxu0 0.0
    %267 = vmatpush1.msra.mxu0 %v233
    %268 = vmatprep.subr.mxu0 0.0
    %269 = vmatpush1.msra.mxu0 %v232
    %270 = vmatprep.subr.mxu0 0.0
    %271 = vmatpush1.msra.mxu0 %v231
    %272 = vmatprep.subr.mxu0 0.0
    %273 = vmatpush1.msra.mxu0 %v230
    %274 = vmatprep.subr.mxu0 0.0
    %275 = vmatpush1.msra.mxu0 %v229
    %276 = vmatprep.subr.mxu0 0.0
    %277 = vmatpush1.msra.mxu0 %v228
    %278 = vmatprep.subr.mxu0 0.0
    %279 = vmatpush2.msra.mxu0 0.0
    %280 = vmatprep.subr.mxu0 0.0
    %281 = vmatpush2.msra.mxu0 0.0
    %282 = vmatprep.subr.mxu0 0.0
    %283 = vmatpush2.msra.mxu0 0.0
    %284 = vmatprep.subr.mxu0 0.0
    %285 = vmatpush2.msra.mxu0 0.0
    %286 = vmatprep.subr.mxu0 0.0
    %287 = vmatpush2.msra.mxu0 0.0
    %288 = vmatprep.subr.mxu0 0.0
    %289 = vmatpush2.msra.mxu0 0.0
    %290 = vmatprep.subr.mxu0 0.0
    %291 = vmatpush2.msra.mxu0 0.0
    %292 = vmatprep.subr.mxu0 0.0
    %293 = vmatpush2.msra.mxu0 0.0
    %294 = vmatprep.subr.mxu0 0.0
    %295 = vmatpush2.msra.mxu0 0.0
    %296 = vmatprep.subr.mxu0 0.0
    %297 = vmatpush2.msra.mxu0 0.0
    %298 = vmatprep.subr.mxu0 0.0
    %299 = vmatpush2.msra.mxu0 0.0
    %300 = vmatprep.subr.mxu0 0.0
    %301 = vmatpush2.msra.mxu0 0.0
    %302 = vmatprep.subr.mxu0 0.0
    %303 = vmatpush2.msra.mxu0 0.0
    %304 = vmatprep.subr.mxu0 0.0
    %305 = vmatpush2.msra.mxu0 0.0
    %306 = vmatprep.subr.mxu0 0.0
    %307 = vmatpush2.msra.mxu0 0.0
    %308 = vmatprep.subr.mxu0 0.0
    %309 = vmatpush2.msra.mxu0 0.0
    %310 = vmatprep.mubr.f32.mxu0 0.0
    %311 = vmatmul.mubr.f32.gmra.mxu0 %v242
    %v312 = vpop.f32.mrf.mxu0
    %v313 = vadd.f32 0.0, %v312
    %v314 = vpop.f32.mrf.mxu0
    %315 = vmatprep.mubr.f32.mxu0 0.0
    %316 = vmatmul.mubr.f32.gmra.mxu0 %v244
    %v317 = vpop.f32.mrf.mxu0
    %v318 = vadd.f32 0.0, %v317
    %v319 = vpop.f32.mrf.mxu0
    %320 = vdwg.mxu0
    %v321 = vadd.f32 %v219, %v313
    %v322 = vadd.f32 %v224, %v318
    %v323 = vld [vmem:[%s2] sm:$0x1]
    %v324 = vlaneseq
    %v325 = vshrl.u32 %v324, 7
    %v326 = vsub.s32 0, %v325
    %v327 = vrot.slane %v323, %v326
    %v328 = vadd.f32 %v321, %v327
    %v329 = vadd.f32 %v322, %v327
    %v330 = vmax.f32 %v328, 0.0
    %v331 = vmax.f32 %v329, 0.0
    %v332 = vld [vmem:[%s2 + $0x1] sm:$0x1]
    %v333 = vlaneseq
    %v334 = vshrl.u32 %v333, 7
    %v335 = vsub.s32 0, %v334
    %v336 = vrot.slane %v332, %v335
    %v337 = vmul.f32 %v330, %v336
    %v338 = vmul.f32 %v331, %v336
    %v339 = vld [vmem:[%s2 + $0x2] sm:$0x1]
    %v340 = vlaneseq
    %v341 = vshrl.u32 %v340, 7
    %v342 = vsub.s32 0, %v341
    %v343 = vrot.slane %v339, %v342
    %v344 = vadd.f32 %v337, %v343
    %v345 = vadd.f32 %v338, %v343
    %348 = vrot.lane.b32.xlu0 %v344, 64
    %v349 = vpop.permute.xlu0 %348
    %350 = vrot.lane.b32.xlu0 %v345, 64
    %v351 = vpop.permute.xlu0 %350
    %v354 = vmax.f32 %v344, %v349
    %v355 = vmax.f32 %v345, %v351
    %v356 = vld [vmem:[%s3] sm:$0xff]
    %vm357 = vcmask 130048
    %v359 = vsel %vm357, %v356, 0
    %361 = vmatprep.subr.mxu0 0.0
    %362 = vmatpush1.msra.mxu0 0.0
    %363 = vmatprep.subr.mxu0 0.0
    %364 = vmatpush1.msra.mxu0 0.0
    %365 = vmatprep.subr.mxu0 0.0
    %366 = vmatpush1.msra.mxu0 0.0
    %367 = vmatprep.subr.mxu0 0.0
    %368 = vmatpush1.msra.mxu0 0.0
    %369 = vmatprep.subr.mxu0 0.0
    %370 = vmatpush1.msra.mxu0 0.0
    %371 = vmatprep.subr.mxu0 0.0
    %372 = vmatpush1.msra.mxu0 0.0
    %373 = vmatprep.subr.mxu0 0.0
    %374 = vmatpush1.msra.mxu0 0.0
    %375 = vmatprep.subr.mxu0 0.0
    %376 = vmatpush1.msra.mxu0 0.0
    %377 = vmatprep.subr.mxu0 0.0
    %378 = vmatpush1.msra.mxu0 0.0
    %379 = vmatprep.subr.mxu0 0.0
    %380 = vmatpush1.msra.mxu0 0.0
    %381 = vmatprep.subr.mxu0 0.0
    %382 = vmatpush1.msra.mxu0 0.0
    %383 = vmatprep.subr.mxu0 0.0
    %384 = vmatpush1.msra.mxu0 0.0
    %385 = vmatprep.subr.mxu0 0.0
    %386 = vmatpush1.msra.mxu0 0.0
    %387 = vmatprep.subr.mxu0 0.0
    %388 = vmatpush1.msra.mxu0 0.0
    %389 = vmatprep.subr.mxu0 0.0
    %390 = vmatpush1.msra.mxu0 %v355
    %391 = vmatprep.subr.mxu0 0.0
    %392 = vmatpush1.msra.mxu0 %v354
    %393 = vmatprep.subr.mxu0 0.0
    %394 = vmatpush2.msra.mxu0 0.0
    %395 = vmatprep.subr.mxu0 0.0
    %396 = vmatpush2.msra.mxu0 0.0
    %397 = vmatprep.subr.mxu0 0.0
    %398 = vmatpush2.msra.mxu0 0.0
    %399 = vmatprep.subr.mxu0 0.0
    %400 = vmatpush2.msra.mxu0 0.0
    %401 = vmatprep.subr.mxu0 0.0
    %402 = vmatpush2.msra.mxu0 0.0
    %403 = vmatprep.subr.mxu0 0.0
    %404 = vmatpush2.msra.mxu0 0.0
    %405 = vmatprep.subr.mxu0 0.0
    %406 = vmatpush2.msra.mxu0 0.0
    %407 = vmatprep.subr.mxu0 0.0
    %408 = vmatpush2.msra.mxu0 0.0
    %409 = vmatprep.subr.mxu0 0.0
    %410 = vmatpush2.msra.mxu0 0.0
    %411 = vmatprep.subr.mxu0 0.0
    %412 = vmatpush2.msra.mxu0 0.0
    %413 = vmatprep.subr.mxu0 0.0
    %414 = vmatpush2.msra.mxu0 0.0
    %415 = vmatprep.subr.mxu0 0.0
    %416 = vmatpush2.msra.mxu0 0.0
    %417 = vmatprep.subr.mxu0 0.0
    %418 = vmatpush2.msra.mxu0 0.0
    %419 = vmatprep.subr.mxu0 0.0
    %420 = vmatpush2.msra.mxu0 0.0
    %421 = vmatprep.subr.mxu0 0.0
    %422 = vmatpush2.msra.mxu0 0.0
    %423 = vmatprep.subr.mxu0 0.0
    %424 = vmatpush2.msra.mxu0 0.0
    %425 = vmatprep.mubr.f32.mxu0 0.0
    %426 = vmatmul.mubr.f32.gmra.mxu0 %v359
    %v427 = vpop.f32.mrf.mxu0
    %v428 = vadd.f32 0.0, %v427
    %v429 = vpop.f32.mrf.mxu0
    %430 = vdwg.mxu0
    %s431 = scalar_lea.vmem %s3, 8
    %v432 = vld [vmem:[%s431] sm:$0xff]
    %v434 = vsel %vm357, %v432, 0
    %436 = vmatprep.subr.mxu0 0.0
    %437 = vmatpush1.msra.mxu0 0.0
    %438 = vmatprep.subr.mxu0 0.0
    %439 = vmatpush1.msra.mxu0 0.0
    %440 = vmatprep.subr.mxu0 0.0
    %441 = vmatpush1.msra.mxu0 0.0
    %442 = vmatprep.subr.mxu0 0.0
    %443 = vmatpush1.msra.mxu0 0.0
    %444 = vmatprep.subr.mxu0 0.0
    %445 = vmatpush1.msra.mxu0 0.0
    %446 = vmatprep.subr.mxu0 0.0
    %447 = vmatpush1.msra.mxu0 0.0
    %448 = vmatprep.subr.mxu0 0.0
    %449 = vmatpush1.msra.mxu0 0.0
    %450 = vmatprep.subr.mxu0 0.0
    %451 = vmatpush1.msra.mxu0 0.0
    %452 = vmatprep.subr.mxu0 0.0
    %453 = vmatpush1.msra.mxu0 0.0
    %454 = vmatprep.subr.mxu0 0.0
    %455 = vmatpush1.msra.mxu0 0.0
    %456 = vmatprep.subr.mxu0 0.0
    %457 = vmatpush1.msra.mxu0 0.0
    %458 = vmatprep.subr.mxu0 0.0
    %459 = vmatpush1.msra.mxu0 0.0
    %460 = vmatprep.subr.mxu0 0.0
    %461 = vmatpush1.msra.mxu0 0.0
    %462 = vmatprep.subr.mxu0 0.0
    %463 = vmatpush1.msra.mxu0 0.0
    %464 = vmatprep.subr.mxu0 0.0
    %465 = vmatpush1.msra.mxu0 %v355
    %466 = vmatprep.subr.mxu0 0.0
    %467 = vmatpush1.msra.mxu0 %v354
    %468 = vmatprep.subr.mxu0 0.0
    %469 = vmatpush2.msra.mxu0 0.0
    %470 = vmatprep.subr.mxu0 0.0
    %471 = vmatpush2.msra.mxu0 0.0
    %472 = vmatprep.subr.mxu0 0.0
    %473 = vmatpush2.msra.mxu0 0.0
    %474 = vmatprep.subr.mxu0 0.0
    %475 = vmatpush2.msra.mxu0 0.0
    %476 = vmatprep.subr.mxu0 0.0
    %477 = vmatpush2.msra.mxu0 0.0
    %478 = vmatprep.subr.mxu0 0.0
    %479 = vmatpush2.msra.mxu0 0.0
    %480 = vmatprep.subr.mxu0 0.0
    %481 = vmatpush2.msra.mxu0 0.0
    %482 = vmatprep.subr.mxu0 0.0
    %483 = vmatpush2.msra.mxu0 0.0
    %484 = vmatprep.subr.mxu0 0.0
    %485 = vmatpush2.msra.mxu0 0.0
    %486 = vmatprep.subr.mxu0 0.0
    %487 = vmatpush2.msra.mxu0 0.0
    %488 = vmatprep.subr.mxu0 0.0
    %489 = vmatpush2.msra.mxu0 0.0
    %490 = vmatprep.subr.mxu0 0.0
    %491 = vmatpush2.msra.mxu0 0.0
    %492 = vmatprep.subr.mxu0 0.0
    %493 = vmatpush2.msra.mxu0 0.0
    %494 = vmatprep.subr.mxu0 0.0
    %495 = vmatpush2.msra.mxu0 0.0
    %496 = vmatprep.subr.mxu0 0.0
    %497 = vmatpush2.msra.mxu0 0.0
    %498 = vmatprep.subr.mxu0 0.0
    %499 = vmatpush2.msra.mxu0 0.0
    %500 = vmatprep.mubr.f32.mxu0 0.0
    %501 = vmatmul.mubr.f32.gmra.mxu0 %v434
    %v502 = vpop.f32.mrf.mxu0
    %v503 = vadd.f32 0.0, %v502
    %v504 = vpop.f32.mrf.mxu0
    %505 = vdwg.mxu0
    %v506 = vmax.f32 %v428, %v503
    %vm507 = vcmask 516096
    %508 = vst.msk [vmem:[#allocation2] sm:$0x1] %vm507, 0.0
    %509 = vst.msk [vmem:[#allocation2 + $0x9] sm:$0x1] %vm507, 0.0
    %510 = vst.msk [vmem:[#allocation2 + $0x1] sm:$0xff] %vm68, %v506
    %v511 = vld [vmem:[#allocation2] sm:$0xff]
    %v512 = vld [vmem:[#allocation2 + $0x8] sm:$0x3]
    %v513 = vld [vmem:[%s4] sm:$0xff]
    %v514 = vld [vmem:[%s4 + $0x8] sm:$0xff]
    %v515 = vld [vmem:[%s4 + $0x10] sm:$0xff]
    %v516 = vld [vmem:[%s4 + $0x18] sm:$0xff]
    %v517 = vld [vmem:[%s4 + $0x20] sm:$0xff]
    %v518 = vld [vmem:[%s4 + $0x28] sm:$0xff]
    %v519 = vld [vmem:[%s4 + $0x30] sm:$0xff]
    %v520 = vld [vmem:[%s4 + $0x38] sm:$0xff]
    %s521 = scalar_lea.vmem %s4, 64
    %v522 = vld [vmem:[%s521] sm:$0xff]
    %v523 = vld [vmem:[%s521 + $0x8] sm:$0xff]
    %v524 = vld [vmem:[%s521 + $0x10] sm:$0xff]
    %v525 = vld [vmem:[%s521 + $0x18] sm:$0xff]
    %v526 = vld [vmem:[%s521 + $0x20] sm:$0xff]
    %v527 = vld [vmem:[%s521 + $0x28] sm:$0xff]
    %v528 = vld [vmem:[%s521 + $0x30] sm:$0xff]
    %v529 = vld [vmem:[%s521 + $0x38] sm:$0xff]
    %v532 = vrot.slane %v511, 1
    %v533 = vrot.slane %v512, 1
    %v534 = vsel %vm62, %v532, %v533
    %v535 = vsel %vm68, %v534, 0
    %537 = vmatprep.subr.mxu0 0.0
    %538 = vmatpush1.msra.mxu0 0.0
    %539 = vmatprep.subr.mxu0 0.0
    %540 = vmatpush1.msra.mxu0 0.0
    %541 = vmatprep.subr.mxu0 0.0
    %542 = vmatpush1.msra.mxu0 0.0
    %543 = vmatprep.subr.mxu0 0.0
    %544 = vmatpush1.msra.mxu0 0.0
    %545 = vmatprep.subr.mxu0 0.0
    %546 = vmatpush1.msra.mxu0 0.0
    %547 = vmatprep.subr.mxu0 0.0
    %548 = vmatpush1.msra.mxu0 0.0
    %549 = vmatprep.subr.mxu0 0.0
    %550 = vmatpush1.msra.mxu0 0.0
    %551 = vmatprep.subr.mxu0 0.0
    %552 = vmatpush1.msra.mxu0 0.0
    %553 = vmatprep.subr.mxu0 0.0
    %554 = vmatpush1.msra.mxu0 %v529
    %555 = vmatprep.subr.mxu0 0.0
    %556 = vmatpush1.msra.mxu0 %v528
    %557 = vmatprep.subr.mxu0 0.0
    %558 = vmatpush1.msra.mxu0 %v527
    %559 = vmatprep.subr.mxu0 0.0
    %560 = vmatpush1.msra.mxu0 %v526
    %561 = vmatprep.subr.mxu0 0.0
    %562 = vmatpush1.msra.mxu0 %v525
    %563 = vmatprep.subr.mxu0 0.0
    %564 = vmatpush1.msra.mxu0 %v524
    %565 = vmatprep.subr.mxu0 0.0
    %566 = vmatpush1.msra.mxu0 %v523
    %567 = vmatprep.subr.mxu0 0.0
    %568 = vmatpush1.msra.mxu0 %v522
    %569 = vmatprep.subr.mxu0 0.0
    %570 = vmatpush2.msra.mxu0 0.0
    %571 = vmatprep.subr.mxu0 0.0
    %572 = vmatpush2.msra.mxu0 0.0
    %573 = vmatprep.subr.mxu0 0.0
    %574 = vmatpush2.msra.mxu0 0.0
    %575 = vmatprep.subr.mxu0 0.0
    %576 = vmatpush2.msra.mxu0 0.0
    %577 = vmatprep.subr.mxu0 0.0
    %578 = vmatpush2.msra.mxu0 0.0
    %579 = vmatprep.subr.mxu0 0.0
    %580 = vmatpush2.msra.mxu0 0.0
    %581 = vmatprep.subr.mxu0 0.0
    %582 = vmatpush2.msra.mxu0 0.0
    %583 = vmatprep.subr.mxu0 0.0
    %584 = vmatpush2.msra.mxu0 0.0
    %585 = vmatprep.subr.mxu0 0.0
    %586 = vmatpush2.msra.mxu0 0.0
    %587 = vmatprep.subr.mxu0 0.0
    %588 = vmatpush2.msra.mxu0 0.0
    %589 = vmatprep.subr.mxu0 0.0
    %590 = vmatpush2.msra.mxu0 0.0
    %591 = vmatprep.subr.mxu0 0.0
    %592 = vmatpush2.msra.mxu0 0.0
    %593 = vmatprep.subr.mxu0 0.0
    %594 = vmatpush2.msra.mxu0 0.0
    %595 = vmatprep.subr.mxu0 0.0
    %596 = vmatpush2.msra.mxu0 0.0
    %597 = vmatprep.subr.mxu0 0.0
    %598 = vmatpush2.msra.mxu0 0.0
    %599 = vmatprep.subr.mxu0 0.0
    %600 = vmatpush2.msra.mxu0 0.0
    %601 = vmatprep.mubr.f32.mxu0 0.0
    %602 = vmatmul.mubr.f32.gmra.mxu0 %v535
    %v603 = vpop.f32.mrf.mxu0
    %v604 = vadd.f32 0.0, %v603
    %v605 = vpop.f32.mrf.mxu0
    %606 = vdwg.mxu0
    %v607 = vsel %vm68, %v511, 0
    %609 = vmatprep.subr.mxu0 0.0
    %610 = vmatpush1.msra.mxu0 0.0
    %611 = vmatprep.subr.mxu0 0.0
    %612 = vmatpush1.msra.mxu0 0.0
    %613 = vmatprep.subr.mxu0 0.0
    %614 = vmatpush1.msra.mxu0 0.0
    %615 = vmatprep.subr.mxu0 0.0
    %616 = vmatpush1.msra.mxu0 0.0
    %617 = vmatprep.subr.mxu0 0.0
    %618 = vmatpush1.msra.mxu0 0.0
    %619 = vmatprep.subr.mxu0 0.0
    %620 = vmatpush1.msra.mxu0 0.0
    %621 = vmatprep.subr.mxu0 0.0
    %622 = vmatpush1.msra.mxu0 0.0
    %623 = vmatprep.subr.mxu0 0.0
    %624 = vmatpush1.msra.mxu0 0.0
    %625 = vmatprep.subr.mxu0 0.0
    %626 = vmatpush1.msra.mxu0 %v520
    %627 = vmatprep.subr.mxu0 0.0
    %628 = vmatpush1.msra.mxu0 %v519
    %629 = vmatprep.subr.mxu0 0.0
    %630 = vmatpush1.msra.mxu0 %v518
    %631 = vmatprep.subr.mxu0 0.0
    %632 = vmatpush1.msra.mxu0 %v517
    %633 = vmatprep.subr.mxu0 0.0
    %634 = vmatpush1.msra.mxu0 %v516
    %635 = vmatprep.subr.mxu0 0.0
    %636 = vmatpush1.msra.mxu0 %v515
    %637 = vmatprep.subr.mxu0 0.0
    %638 = vmatpush1.msra.mxu0 %v514
    %639 = vmatprep.subr.mxu0 0.0
    %640 = vmatpush1.msra.mxu0 %v513
    %641 = vmatprep.subr.mxu0 0.0
    %642 = vmatpush2.msra.mxu0 0.0
    %643 = vmatprep.subr.mxu0 0.0
    %644 = vmatpush2.msra.mxu0 0.0
    %645 = vmatprep.subr.mxu0 0.0
    %646 = vmatpush2.msra.mxu0 0.0
    %647 = vmatprep.subr.mxu0 0.0
    %648 = vmatpush2.msra.mxu0 0.0
    %649 = vmatprep.subr.mxu0 0.0
    %650 = vmatpush2.msra.mxu0 0.0
    %651 = vmatprep.subr.mxu0 0.0
    %652 = vmatpush2.msra.mxu0 0.0
    %653 = vmatprep.subr.mxu0 0.0
    %654 = vmatpush2.msra.mxu0 0.0
    %655 = vmatprep.subr.mxu0 0.0
    %656 = vmatpush2.msra.mxu0 0.0
    %657 = vmatprep.subr.mxu0 0.0
    %658 = vmatpush2.msra.mxu0 0.0
    %659 = vmatprep.subr.mxu0 0.0
    %660 = vmatpush2.msra.mxu0 0.0
    %661 = vmatprep.subr.mxu0 0.0
    %662 = vmatpush2.msra.mxu0 0.0
    %663 = vmatprep.subr.mxu0 0.0
    %664 = vmatpush2.msra.mxu0 0.0
    %665 = vmatprep.subr.mxu0 0.0
    %666 = vmatpush2.msra.mxu0 0.0
    %667 = vmatprep.subr.mxu0 0.0
    %668 = vmatpush2.msra.mxu0 0.0
    %669 = vmatprep.subr.mxu0 0.0
    %670 = vmatpush2.msra.mxu0 0.0
    %671 = vmatprep.subr.mxu0 0.0
    %672 = vmatpush2.msra.mxu0 0.0
    %673 = vmatprep.mubr.f32.mxu0 0.0
    %674 = vmatmul.mubr.f32.gmra.mxu0 %v607
    %v675 = vpop.f32.mrf.mxu0
    %v676 = vadd.f32 %v604, %v675
    %v677 = vpop.f32.mrf.mxu0
    %678 = vdwg.mxu0
    %s679 = scalar_lea.vmem %s4, 128
    %v680 = vld [vmem:[%s679] sm:$0xff]
    %v681 = vld [vmem:[%s679 + $0x8] sm:$0xff]
    %v682 = vld [vmem:[%s679 + $0x10] sm:$0xff]
    %v683 = vld [vmem:[%s679 + $0x18] sm:$0xff]
    %v684 = vld [vmem:[%s679 + $0x20] sm:$0xff]
    %v685 = vld [vmem:[%s679 + $0x28] sm:$0xff]
    %v686 = vld [vmem:[%s679 + $0x30] sm:$0xff]
    %v687 = vld [vmem:[%s679 + $0x38] sm:$0xff]
    %v688 = vrot.slane %v511, 2
    %v689 = vrot.slane %v512, 2
    %v690 = vsel %vm236, %v688, %v689
    %v691 = vsel %vm68, %v690, 0
    %693 = vmatprep.subr.mxu0 0.0
    %694 = vmatpush1.msra.mxu0 0.0
    %695 = vmatprep.subr.mxu0 0.0
    %696 = vmatpush1.msra.mxu0 0.0
    %697 = vmatprep.subr.mxu0 0.0
    %698 = vmatpush1.msra.mxu0 0.0
    %699 = vmatprep.subr.mxu0 0.0
    %700 = vmatpush1.msra.mxu0 0.0
    %701 = vmatprep.subr.mxu0 0.0
    %702 = vmatpush1.msra.mxu0 0.0
    %703 = vmatprep.subr.mxu0 0.0
    %704 = vmatpush1.msra.mxu0 0.0
    %705 = vmatprep.subr.mxu0 0.0
    %706 = vmatpush1.msra.mxu0 0.0
    %707 = vmatprep.subr.mxu0 0.0
    %708 = vmatpush1.msra.mxu0 0.0
    %709 = vmatprep.subr.mxu0 0.0
    %710 = vmatpush1.msra.mxu0 %v687
    %711 = vmatprep.subr.mxu0 0.0
    %712 = vmatpush1.msra.mxu0 %v686
    %713 = vmatprep.subr.mxu0 0.0
    %714 = vmatpush1.msra.mxu0 %v685
    %715 = vmatprep.subr.mxu0 0.0
    %716 = vmatpush1.msra.mxu0 %v684
    %717 = vmatprep.subr.mxu0 0.0
    %718 = vmatpush1.msra.mxu0 %v683
    %719 = vmatprep.subr.mxu0 0.0
    %720 = vmatpush1.msra.mxu0 %v682
    %721 = vmatprep.subr.mxu0 0.0
    %722 = vmatpush1.msra.mxu0 %v681
    %723 = vmatprep.subr.mxu0 0.0
    %724 = vmatpush1.msra.mxu0 %v680
    %725 = vmatprep.subr.mxu0 0.0
    %726 = vmatpush2.msra.mxu0 0.0
    %727 = vmatprep.subr.mxu0 0.0
    %728 = vmatpush2.msra.mxu0 0.0
    %729 = vmatprep.subr.mxu0 0.0
    %730 = vmatpush2.msra.mxu0 0.0
    %731 = vmatprep.subr.mxu0 0.0
    %732 = vmatpush2.msra.mxu0 0.0
    %733 = vmatprep.subr.mxu0 0.0
    %734 = vmatpush2.msra.mxu0 0.0
    %735 = vmatprep.subr.mxu0 0.0
    %736 = vmatpush2.msra.mxu0 0.0
    %737 = vmatprep.subr.mxu0 0.0
    %738 = vmatpush2.msra.mxu0 0.0
    %739 = vmatprep.subr.mxu0 0.0
    %740 = vmatpush2.msra.mxu0 0.0
    %741 = vmatprep.subr.mxu0 0.0
    %742 = vmatpush2.msra.mxu0 0.0
    %743 = vmatprep.subr.mxu0 0.0
    %744 = vmatpush2.msra.mxu0 0.0
    %745 = vmatprep.subr.mxu0 0.0
    %746 = vmatpush2.msra.mxu0 0.0
    %747 = vmatprep.subr.mxu0 0.0
    %748 = vmatpush2.msra.mxu0 0.0
    %749 = vmatprep.subr.mxu0 0.0
    %750 = vmatpush2.msra.mxu0 0.0
    %751 = vmatprep.subr.mxu0 0.0
    %752 = vmatpush2.msra.mxu0 0.0
    %753 = vmatprep.subr.mxu0 0.0
    %754 = vmatpush2.msra.mxu0 0.0
    %755 = vmatprep.subr.mxu0 0.0
    %756 = vmatpush2.msra.mxu0 0.0
    %757 = vmatprep.mubr.f32.mxu0 0.0
    %758 = vmatmul.mubr.f32.gmra.mxu0 %v691
    %v759 = vpop.f32.mrf.mxu0
    %v760 = vadd.f32 0.0, %v759
    %v761 = vpop.f32.mrf.mxu0
    %762 = vdwg.mxu0
    %v763 = vadd.f32 %v676, %v760
    %v764 = vld [vmem:[%s5] sm:$0x1]
    %v765 = vlaneseq
    %v766 = vshrl.u32 %v765, 7
    %v767 = vsub.s32 0, %v766
    %v768 = vrot.slane %v764, %v767
    %v769 = vadd.f32 %v763, %v768
    %v770 = vmax.f32 %v769, 0.0
    %v771 = vld [vmem:[%s5 + $0x1] sm:$0x1]
    %v772 = vlaneseq
    %v773 = vshrl.u32 %v772, 7
    %v774 = vsub.s32 0, %v773
    %v775 = vrot.slane %v771, %v774
    %v776 = vmul.f32 %v770, %v775
    %v777 = vld [vmem:[%s5 + $0x2] sm:$0x1]
    %v778 = vlaneseq
    %v779 = vshrl.u32 %v778, 7
    %v780 = vsub.s32 0, %v779
    %v781 = vrot.slane %v777, %v780
    %v782 = vadd.f32 %v776, %v781
    %784 = vrot.lane.b32.xlu0 %v782, 64
    %v785 = vpop.permute.xlu0 %784
    %v787 = vmax.f32 %v782, %v785
    %v788 = vld [vmem:[%s6] sm:$0xf]
    %vm789 = vcmask 64512
    %v791 = vsel %vm789, %v788, 0
    %793 = vmatprep.subr.mxu0 0.0
    %794 = vmatpush1.msra.mxu0 0.0
    %795 = vmatprep.subr.mxu0 0.0
    %796 = vmatpush1.msra.mxu0 0.0
    %797 = vmatprep.subr.mxu0 0.0
    %798 = vmatpush1.msra.mxu0 0.0
    %799 = vmatprep.subr.mxu0 0.0
    %800 = vmatpush1.msra.mxu0 0.0
    %801 = vmatprep.subr.mxu0 0.0
    %802 = vmatpush1.msra.mxu0 0.0
    %803 = vmatprep.subr.mxu0 0.0
    %804 = vmatpush1.msra.mxu0 0.0
    %805 = vmatprep.subr.mxu0 0.0
    %806 = vmatpush1.msra.mxu0 0.0
    %807 = vmatprep.subr.mxu0 0.0
    %808 = vmatpush1.msra.mxu0 0.0
    %809 = vmatprep.subr.mxu0 0.0
    %810 = vmatpush1.msra.mxu0 0.0
    %811 = vmatprep.subr.mxu0 0.0
    %812 = vmatpush1.msra.mxu0 0.0
    %813 = vmatprep.subr.mxu0 0.0
    %814 = vmatpush1.msra.mxu0 0.0
    %815 = vmatprep.subr.mxu0 0.0
    %816 = vmatpush1.msra.mxu0 0.0
    %817 = vmatprep.subr.mxu0 0.0
    %818 = vmatpush1.msra.mxu0 0.0
    %819 = vmatprep.subr.mxu0 0.0
    %820 = vmatpush1.msra.mxu0 0.0
    %821 = vmatprep.subr.mxu0 0.0
    %822 = vmatpush1.msra.mxu0 0.0
    %823 = vmatprep.subr.mxu0 0.0
    %824 = vmatpush1.msra.mxu0 %v787
    %825 = vmatprep.subr.mxu0 0.0
    %826 = vmatpush2.msra.mxu0 0.0
    %827 = vmatprep.subr.mxu0 0.0
    %828 = vmatpush2.msra.mxu0 0.0
    %829 = vmatprep.subr.mxu0 0.0
    %830 = vmatpush2.msra.mxu0 0.0
    %831 = vmatprep.subr.mxu0 0.0
    %832 = vmatpush2.msra.mxu0 0.0
    %833 = vmatprep.subr.mxu0 0.0
    %834 = vmatpush2.msra.mxu0 0.0
    %835 = vmatprep.subr.mxu0 0.0
    %836 = vmatpush2.msra.mxu0 0.0
    %837 = vmatprep.subr.mxu0 0.0
    %838 = vmatpush2.msra.mxu0 0.0
    %839 = vmatprep.subr.mxu0 0.0
    %840 = vmatpush2.msra.mxu0 0.0
    %841 = vmatprep.subr.mxu0 0.0
    %842 = vmatpush2.msra.mxu0 0.0
    %843 = vmatprep.subr.mxu0 0.0
    %844 = vmatpush2.msra.mxu0 0.0
    %845 = vmatprep.subr.mxu0 0.0
    %846 = vmatpush2.msra.mxu0 0.0
    %847 = vmatprep.subr.mxu0 0.0
    %848 = vmatpush2.msra.mxu0 0.0
    %849 = vmatprep.subr.mxu0 0.0
    %850 = vmatpush2.msra.mxu0 0.0
    %851 = vmatprep.subr.mxu0 0.0
    %852 = vmatpush2.msra.mxu0 0.0
    %853 = vmatprep.subr.mxu0 0.0
    %854 = vmatpush2.msra.mxu0 0.0
    %855 = vmatprep.subr.mxu0 0.0
    %856 = vmatpush2.msra.mxu0 0.0
    %857 = vmatprep.mubr.f32.mxu0 0.0
    %858 = vmatmul.mubr.f32.gmra.mxu0 %v791
    %v859 = vpop.f32.mrf.mxu0
    %v860 = vadd.f32 0.0, %v859
    %v861 = vpop.f32.mrf.mxu0
    %862 = vdwg.mxu0
    %s863 = scalar_lea.vmem %s6, 4
    %v864 = vld [vmem:[%s863] sm:$0xf]
    %v866 = vsel %vm789, %v864, 0
    %868 = vmatprep.subr.mxu0 0.0
    %869 = vmatpush1.msra.mxu0 0.0
    %870 = vmatprep.subr.mxu0 0.0
    %871 = vmatpush1.msra.mxu0 0.0
    %872 = vmatprep.subr.mxu0 0.0
    %873 = vmatpush1.msra.mxu0 0.0
    %874 = vmatprep.subr.mxu0 0.0
    %875 = vmatpush1.msra.mxu0 0.0
    %876 = vmatprep.subr.mxu0 0.0
    %877 = vmatpush1.msra.mxu0 0.0
    %878 = vmatprep.subr.mxu0 0.0
    %879 = vmatpush1.msra.mxu0 0.0
    %880 = vmatprep.subr.mxu0 0.0
    %881 = vmatpush1.msra.mxu0 0.0
    %882 = vmatprep.subr.mxu0 0.0
    %883 = vmatpush1.msra.mxu0 0.0
    %884 = vmatprep.subr.mxu0 0.0
    %885 = vmatpush1.msra.mxu0 0.0
    %886 = vmatprep.subr.mxu0 0.0
    %887 = vmatpush1.msra.mxu0 0.0
    %888 = vmatprep.subr.mxu0 0.0
    %889 = vmatpush1.msra.mxu0 0.0
    %890 = vmatprep.subr.mxu0 0.0
    %891 = vmatpush1.msra.mxu0 0.0
    %892 = vmatprep.subr.mxu0 0.0
    %893 = vmatpush1.msra.mxu0 0.0
    %894 = vmatprep.subr.mxu0 0.0
    %895 = vmatpush1.msra.mxu0 0.0
    %896 = vmatprep.subr.mxu0 0.0
    %897 = vmatpush1.msra.mxu0 0.0
    %898 = vmatprep.subr.mxu0 0.0
    %899 = vmatpush1.msra.mxu0 %v787
    %900 = vmatprep.subr.mxu0 0.0
    %901 = vmatpush2.msra.mxu0 0.0
    %902 = vmatprep.subr.mxu0 0.0
    %903 = vmatpush2.msra.mxu0 0.0
    %904 = vmatprep.subr.mxu0 0.0
    %905 = vmatpush2.msra.mxu0 0.0
    %906 = vmatprep.subr.mxu0 0.0
    %907 = vmatpush2.msra.mxu0 0.0
    %908 = vmatprep.subr.mxu0 0.0
    %909 = vmatpush2.msra.mxu0 0.0
    %910 = vmatprep.subr.mxu0 0.0
    %911 = vmatpush2.msra.mxu0 0.0
    %912 = vmatprep.subr.mxu0 0.0
    %913 = vmatpush2.msra.mxu0 0.0
    %914 = vmatprep.subr.mxu0 0.0
    %915 = vmatpush2.msra.mxu0 0.0
    %916 = vmatprep.subr.mxu0 0.0
    %917 = vmatpush2.msra.mxu0 0.0
    %918 = vmatprep.subr.mxu0 0.0
    %919 = vmatpush2.msra.mxu0 0.0
    %920 = vmatprep.subr.mxu0 0.0
    %921 = vmatpush2.msra.mxu0 0.0
    %922 = vmatprep.subr.mxu0 0.0
    %923 = vmatpush2.msra.mxu0 0.0
    %924 = vmatprep.subr.mxu0 0.0
    %925 = vmatpush2.msra.mxu0 0.0
    %926 = vmatprep.subr.mxu0 0.0
    %927 = vmatpush2.msra.mxu0 0.0
    %928 = vmatprep.subr.mxu0 0.0
    %929 = vmatpush2.msra.mxu0 0.0
    %930 = vmatprep.subr.mxu0 0.0
    %931 = vmatpush2.msra.mxu0 0.0
    %932 = vmatprep.mubr.f32.mxu0 0.0
    %933 = vmatmul.mubr.f32.gmra.mxu0 %v866
    %v934 = vpop.f32.mrf.mxu0
    %v935 = vadd.f32 0.0, %v934
    %v936 = vpop.f32.mrf.mxu0
    %937 = vdwg.mxu0
    %v938 = vmax.f32 %v860, %v935
    %939 = vst.msk [vmem:[#allocation3] sm:$0x1] %vm507, %v938
    %v942 = vunpack.c.l.s4 1983009808
    %v943 = vunpack.c.0.s8 %v942
    %v944 = vlaneseq
    %v945 = vshrl.u32 %v944, 7
    %v946 = vsub.s32 %v943, %v945
    %v947 = vrot.slane %v938, %v946
    %v948 = vrot.slane %v947, 7
    %v949 = vrot.slane %v948, 2
    %950 = vrot.lane.b32.xlu0 %v949, 64
    %v951 = vpop.permute.xlu0 %950
    %vm953 = vcmask 1040896
    %954 = vst.msk [vmem:[#allocation3] sm:$0x1] %vm953, %v951
    %v955 = vcombine.high %v947, %v947
    %957 = vst.msk [vmem:[#allocation3 + $0x2] sm:$0x1] %vm507, %v955
    %v958 = vrot.slane %v955, 7
    %v959 = vrot.slane %v958, 2
    %960 = vrot.lane.b32.xlu0 %v959, 64
    %v961 = vpop.permute.xlu0 %960
    %963 = vst.msk [vmem:[#allocation3 + $0x2] sm:$0x1] %vm953, %v961
    %s964 = scalar_lea.vmem %s0, 24
    %v965 = vld [vmem:[%s964] sm:$0xff]
    %v966 = vld [vmem:[%s964 + $0x8] sm:$0xff]
    %v967 = vld [vmem:[%s964 + $0x10] sm:$0x3]
    %v968 = vld [vmem:[%s1] sm:$0xff]
    %v969 = vld [vmem:[%s1 + $0x8] sm:$0xff]
    %v970 = vld [vmem:[%s1 + $0x10] sm:$0xff]
    %v971 = vld [vmem:[%s1 + $0x18] sm:$0xff]
    %v972 = vld [vmem:[%s1 + $0x20] sm:$0xff]
    %v973 = vld [vmem:[%s1 + $0x28] sm:$0xff]
    %v974 = vld [vmem:[%s1 + $0x30] sm:$0xff]
    %v975 = vld [vmem:[%s1 + $0x38] sm:$0xff]
    %v976 = vld [vmem:[%s50] sm:$0xff]
    %v977 = vld [vmem:[%s50 + $0x8] sm:$0xff]
    %v978 = vld [vmem:[%s50 + $0x10] sm:$0xff]
    %v979 = vld [vmem:[%s50 + $0x18] sm:$0xff]
    %v980 = vld [vmem:[%s50 + $0x20] sm:$0xff]
    %v981 = vld [vmem:[%s50 + $0x28] sm:$0xff]
    %v982 = vld [vmem:[%s50 + $0x30] sm:$0xff]
    %v983 = vld [vmem:[%s50 + $0x38] sm:$0xff]
    %v987 = vrot.slane %v965, 1
    %v988 = vrot.slane %v966, 1
    %v989 = vsel %vm62, %v987, %v988
    %v990 = vrot.slane %v967, 1
    %v991 = vsel %vm62, %v988, %v990
    %v992 = vsel %vm68, %v989, 0
    %v994 = vsel %vm68, %v991, 0
    %996 = vmatprep.subr.mxu0 0.0
    %997 = vmatpush1.msra.mxu0 0.0
    %998 = vmatprep.subr.mxu0 0.0
    %999 = vmatpush1.msra.mxu0 0.0
    %1000 = vmatprep.subr.mxu0 0.0
    %1001 = vmatpush1.msra.mxu0 0.0
    %1002 = vmatprep.subr.mxu0 0.0
    %1003 = vmatpush1.msra.mxu0 0.0
    %1004 = vmatprep.subr.mxu0 0.0
    %1005 = vmatpush1.msra.mxu0 0.0
    %1006 = vmatprep.subr.mxu0 0.0
    %1007 = vmatpush1.msra.mxu0 0.0
    %1008 = vmatprep.subr.mxu0 0.0
    %1009 = vmatpush1.msra.mxu0 0.0
    %1010 = vmatprep.subr.mxu0 0.0
    %1011 = vmatpush1.msra.mxu0 0.0
    %1012 = vmatprep.subr.mxu0 0.0
    %1013 = vmatpush1.msra.mxu0 %v983
    %1014 = vmatprep.subr.mxu0 0.0
    %1015 = vmatpush1.msra.mxu0 %v982
    %1016 = vmatprep.subr.mxu0 0.0
    %1017 = vmatpush1.msra.mxu0 %v981
    %1018 = vmatprep.subr.mxu0 0.0
    %1019 = vmatpush1.msra.mxu0 %v980
    %1020 = vmatprep.subr.mxu0 0.0
    %1021 = vmatpush1.msra.mxu0 %v979
    %1022 = vmatprep.subr.mxu0 0.0
    %1023 = vmatpush1.msra.mxu0 %v978
    %1024 = vmatprep.subr.mxu0 0.0
    %1025 = vmatpush1.msra.mxu0 %v977
    %1026 = vmatprep.subr.mxu0 0.0
    %1027 = vmatpush1.msra.mxu0 %v976
    %1028 = vmatprep.subr.mxu0 0.0
    %1029 = vmatpush2.msra.mxu0 0.0
    %1030 = vmatprep.subr.mxu0 0.0
    %1031 = vmatpush2.msra.mxu0 0.0
    %1032 = vmatprep.subr.mxu0 0.0
    %1033 = vmatpush2.msra.mxu0 0.0
    %1034 = vmatprep.subr.mxu0 0.0
    %1035 = vmatpush2.msra.mxu0 0.0
    %1036 = vmatprep.subr.mxu0 0.0
    %1037 = vmatpush2.msra.mxu0 0.0
    %1038 = vmatprep.subr.mxu0 0.0
    %1039 = vmatpush2.msra.mxu0 0.0
    %1040 = vmatprep.subr.mxu0 0.0
    %1041 = vmatpush2.msra.mxu0 0.0
    %1042 = vmatprep.subr.mxu0 0.0
    %1043 = vmatpush2.msra.mxu0 0.0
    %1044 = vmatprep.subr.mxu0 0.0
    %1045 = vmatpush2.msra.mxu0 0.0
    %1046 = vmatprep.subr.mxu0 0.0
    %1047 = vmatpush2.msra.mxu0 0.0
    %1048 = vmatprep.subr.mxu0 0.0
    %1049 = vmatpush2.msra.mxu0 0.0
    %1050 = vmatprep.subr.mxu0 0.0
    %1051 = vmatpush2.msra.mxu0 0.0
    %1052 = vmatprep.subr.mxu0 0.0
    %1053 = vmatpush2.msra.mxu0 0.0
    %1054 = vmatprep.subr.mxu0 0.0
    %1055 = vmatpush2.msra.mxu0 0.0
    %1056 = vmatprep.subr.mxu0 0.0
    %1057 = vmatpush2.msra.mxu0 0.0
    %1058 = vmatprep.subr.mxu0 0.0
    %1059 = vmatpush2.msra.mxu0 0.0
    %1060 = vmatprep.mubr.f32.mxu0 0.0
    %1061 = vmatmul.mubr.f32.gmra.mxu0 %v992
    %v1062 = vpop.f32.mrf.mxu0
    %v1063 = vadd.f32 0.0, %v1062
    %v1064 = vpop.f32.mrf.mxu0
    %1065 = vmatprep.mubr.f32.mxu0 0.0
    %1066 = vmatmul.mubr.f32.gmra.mxu0 %v994
    %v1067 = vpop.f32.mrf.mxu0
    %v1068 = vadd.f32 0.0, %v1067
    %v1069 = vpop.f32.mrf.mxu0
    %1070 = vdwg.mxu0
    %v1071 = vsel %vm68, %v965, 0
    %v1073 = vsel %vm68, %v966, 0
    %1075 = vmatprep.subr.mxu0 0.0
    %1076 = vmatpush1.msra.mxu0 0.0
    %1077 = vmatprep.subr.mxu0 0.0
    %1078 = vmatpush1.msra.mxu0 0.0
    %1079 = vmatprep.subr.mxu0 0.0
    %1080 = vmatpush1.msra.mxu0 0.0
    %1081 = vmatprep.subr.mxu0 0.0
    %1082 = vmatpush1.msra.mxu0 0.0
    %1083 = vmatprep.subr.mxu0 0.0
    %1084 = vmatpush1.msra.mxu0 0.0
    %1085 = vmatprep.subr.mxu0 0.0
    %1086 = vmatpush1.msra.mxu0 0.0
    %1087 = vmatprep.subr.mxu0 0.0
    %1088 = vmatpush1.msra.mxu0 0.0
    %1089 = vmatprep.subr.mxu0 0.0
    %1090 = vmatpush1.msra.mxu0 0.0
    %1091 = vmatprep.subr.mxu0 0.0
    %1092 = vmatpush1.msra.mxu0 %v975
    %1093 = vmatprep.subr.mxu0 0.0
    %1094 = vmatpush1.msra.mxu0 %v974
    %1095 = vmatprep.subr.mxu0 0.0
    %1096 = vmatpush1.msra.mxu0 %v973
    %1097 = vmatprep.subr.mxu0 0.0
    %1098 = vmatpush1.msra.mxu0 %v972
    %1099 = vmatprep.subr.mxu0 0.0
    %1100 = vmatpush1.msra.mxu0 %v971
    %1101 = vmatprep.subr.mxu0 0.0
    %1102 = vmatpush1.msra.mxu0 %v970
    %1103 = vmatprep.subr.mxu0 0.0
    %1104 = vmatpush1.msra.mxu0 %v969
    %1105 = vmatprep.subr.mxu0 0.0
    %1106 = vmatpush1.msra.mxu0 %v968
    %1107 = vmatprep.subr.mxu0 0.0
    %1108 = vmatpush2.msra.mxu0 0.0
    %1109 = vmatprep.subr.mxu0 0.0
    %1110 = vmatpush2.msra.mxu0 0.0
    %1111 = vmatprep.subr.mxu0 0.0
    %1112 = vmatpush2.msra.mxu0 0.0
    %1113 = vmatprep.subr.mxu0 0.0
    %1114 = vmatpush2.msra.mxu0 0.0
    %1115 = vmatprep.subr.mxu0 0.0
    %1116 = vmatpush2.msra.mxu0 0.0
    %1117 = vmatprep.subr.mxu0 0.0
    %1118 = vmatpush2.msra.mxu0 0.0
    %1119 = vmatprep.subr.mxu0 0.0
    %1120 = vmatpush2.msra.mxu0 0.0
    %1121 = vmatprep.subr.mxu0 0.0
    %1122 = vmatpush2.msra.mxu0 0.0
    %1123 = vmatprep.subr.mxu0 0.0
    %1124 = vmatpush2.msra.mxu0 0.0
    %1125 = vmatprep.subr.mxu0 0.0
    %1126 = vmatpush2.msra.mxu0 0.0
    %1127 = vmatprep.subr.mxu0 0.0
    %1128 = vmatpush2.msra.mxu0 0.0
    %1129 = vmatprep.subr.mxu0 0.0
    %1130 = vmatpush2.msra.mxu0 0.0
    %1131 = vmatprep.subr.mxu0 0.0
    %1132 = vmatpush2.msra.mxu0 0.0
    %1133 = vmatprep.subr.mxu0 0.0
    %1134 = vmatpush2.msra.mxu0 0.0
    %1135 = vmatprep.subr.mxu0 0.0
    %1136 = vmatpush2.msra.mxu0 0.0
    %1137 = vmatprep.subr.mxu0 0.0
    %1138 = vmatpush2.msra.mxu0 0.0
    %1139 = vmatprep.mubr.f32.mxu0 0.0
    %1140 = vmatmul.mubr.f32.gmra.mxu0 %v1071
    %v1141 = vpop.f32.mrf.mxu0
    %v1142 = vadd.f32 %v1063, %v1141
    %v1143 = vpop.f32.mrf.mxu0
    %1144 = vmatprep.mubr.f32.mxu0 0.0
    %1145 = vmatmul.mubr.f32.gmra.mxu0 %v1073
    %v1146 = vpop.f32.mrf.mxu0
    %v1147 = vadd.f32 %v1068, %v1146
    %v1148 = vpop.f32.mrf.mxu0
    %1149 = vdwg.mxu0
    %v1150 = vld [vmem:[%s227] sm:$0xff]
    %v1151 = vld [vmem:[%s227 + $0x8] sm:$0xff]
    %v1152 = vld [vmem:[%s227 + $0x10] sm:$0xff]
    %v1153 = vld [vmem:[%s227 + $0x18] sm:$0xff]
    %v1154 = vld [vmem:[%s227 + $0x20] sm:$0xff]
    %v1155 = vld [vmem:[%s227 + $0x28] sm:$0xff]
    %v1156 = vld [vmem:[%s227 + $0x30] sm:$0xff]
    %v1157 = vld [vmem:[%s227 + $0x38] sm:$0xff]
    %v1158 = vrot.slane %v965, 2
    %v1159 = vrot.slane %v966, 2
    %v1160 = vsel %vm236, %v1158, %v1159
    %v1161 = vrot.slane %v967, 2
    %v1162 = vsel %vm236, %v1159, %v1161
    %v1163 = vsel %vm68, %v1160, 0
    %v1165 = vsel %vm68, %v1162, 0
    %1167 = vmatprep.subr.mxu0 0.0
    %1168 = vmatpush1.msra.mxu0 0.0
    %1169 = vmatprep.subr.mxu0 0.0
    %1170 = vmatpush1.msra.mxu0 0.0
    %1171 = vmatprep.subr.mxu0 0.0
    %1172 = vmatpush1.msra.mxu0 0.0
    %1173 = vmatprep.subr.mxu0 0.0
    %1174 = vmatpush1.msra.mxu0 0.0
    %1175 = vmatprep.subr.mxu0 0.0
    %1176 = vmatpush1.msra.mxu0 0.0
    %1177 = vmatprep.subr.mxu0 0.0
    %1178 = vmatpush1.msra.mxu0 0.0
    %1179 = vmatprep.subr.mxu0 0.0
    %1180 = vmatpush1.msra.mxu0 0.0
    %1181 = vmatprep.subr.mxu0 0.0
    %1182 = vmatpush1.msra.mxu0 0.0
    %1183 = vmatprep.subr.mxu0 0.0
    %1184 = vmatpush1.msra.mxu0 %v1157
    %1185 = vmatprep.subr.mxu0 0.0
    %1186 = vmatpush1.msra.mxu0 %v1156
    %1187 = vmatprep.subr.mxu0 0.0
    %1188 = vmatpush1.msra.mxu0 %v1155
    %1189 = vmatprep.subr.mxu0 0.0
    %1190 = vmatpush1.msra.mxu0 %v1154
    %1191 = vmatprep.subr.mxu0 0.0
    %1192 = vmatpush1.msra.mxu0 %v1153
    %1193 = vmatprep.subr.mxu0 0.0
    %1194 = vmatpush1.msra.mxu0 %v1152
    %1195 = vmatprep.subr.mxu0 0.0
    %1196 = vmatpush1.msra.mxu0 %v1151
    %1197 = vmatprep.subr.mxu0 0.0
    %1198 = vmatpush1.msra.mxu0 %v1150
    %1199 = vmatprep.subr.mxu0 0.0
    %1200 = vmatpush2.msra.mxu0 0.0
    %1201 = vmatprep.subr.mxu0 0.0
    %1202 = vmatpush2.msra.mxu0 0.0
    %1203 = vmatprep.subr.mxu0 0.0
    %1204 = vmatpush2.msra.mxu0 0.0
    %1205 = vmatprep.subr.mxu0 0.0
    %1206 = vmatpush2.msra.mxu0 0.0
    %1207 = vmatprep.subr.mxu0 0.0
    %1208 = vmatpush2.msra.mxu0 0.0
    %1209 = vmatprep.subr.mxu0 0.0
    %1210 = vmatpush2.msra.mxu0 0.0
    %1211 = vmatprep.subr.mxu0 0.0
    %1212 = vmatpush2.msra.mxu0 0.0
    %1213 = vmatprep.subr.mxu0 0.0
    %1214 = vmatpush2.msra.mxu0 0.0
    %1215 = vmatprep.subr.mxu0 0.0
    %1216 = vmatpush2.msra.mxu0 0.0
    %1217 = vmatprep.subr.mxu0 0.0
    %1218 = vmatpush2.msra.mxu0 0.0
    %1219 = vmatprep.subr.mxu0 0.0
    %1220 = vmatpush2.msra.mxu0 0.0
    %1221 = vmatprep.subr.mxu0 0.0
    %1222 = vmatpush2.msra.mxu0 0.0
    %1223 = vmatprep.subr.mxu0 0.0
    %1224 = vmatpush2.msra.mxu0 0.0
    %1225 = vmatprep.subr.mxu0 0.0
    %1226 = vmatpush2.msra.mxu0 0.0
    %1227 = vmatprep.subr.mxu0 0.0
    %1228 = vmatpush2.msra.mxu0 0.0
    %1229 = vmatprep.subr.mxu0 0.0
    %1230 = vmatpush2.msra.mxu0 0.0
    %1231 = vmatprep.mubr.f32.mxu0 0.0
    %1232 = vmatmul.mubr.f32.gmra.mxu0 %v1163
    %v1233 = vpop.f32.mrf.mxu0
    %v1234 = vadd.f32 0.0, %v1233
    %v1235 = vpop.f32.mrf.mxu0
    %1236 = vmatprep.mubr.f32.mxu0 0.0
    %1237 = vmatmul.mubr.f32.gmra.mxu0 %v1165
    %v1238 = vpop.f32.mrf.mxu0
    %v1239 = vadd.f32 0.0, %v1238
    %v1240 = vpop.f32.mrf.mxu0
    %1241 = vdwg.mxu0
    %v1242 = vadd.f32 %v1142, %v1234
    %v1243 = vadd.f32 %v1147, %v1239
    %v1244 = vld [vmem:[%s2] sm:$0x1]
    %v1245 = vlaneseq
    %v1246 = vshrl.u32 %v1245, 7
    %v1247 = vsub.s32 0, %v1246
    %v1248 = vrot.slane %v1244, %v1247
    %v1249 = vadd.f32 %v1242, %v1248
    %v1250 = vadd.f32 %v1243, %v1248
    %v1251 = vmax.f32 %v1249, 0.0
    %v1252 = vmax.f32 %v1250, 0.0
    %v1253 = vld [vmem:[%s2 + $0x1] sm:$0x1]
    %v1254 = vlaneseq
    %v1255 = vshrl.u32 %v1254, 7
    %v1256 = vsub.s32 0, %v1255
    %v1257 = vrot.slane %v1253, %v1256
    %v1258 = vmul.f32 %v1251, %v1257
    %v1259 = vmul.f32 %v1252, %v1257
    %v1260 = vld [vmem:[%s2 + $0x2] sm:$0x1]
    %v1261 = vlaneseq
    %v1262 = vshrl.u32 %v1261, 7
    %v1263 = vsub.s32 0, %v1262
    %v1264 = vrot.slane %v1260, %v1263
    %v1265 = vadd.f32 %v1258, %v1264
    %v1266 = vadd.f32 %v1259, %v1264
    %1269 = vrot.lane.b32.xlu0 %v1265, 64
    %v1270 = vpop.permute.xlu0 %1269
    %1271 = vrot.lane.b32.xlu0 %v1266, 64
    %v1272 = vpop.permute.xlu0 %1271
    %v1275 = vmax.f32 %v1265, %v1270
    %v1276 = vmax.f32 %v1266, %v1272
    %v1277 = vld [vmem:[%s3] sm:$0xff]
    %v1279 = vsel %vm357, %v1277, 0
    %1281 = vmatprep.subr.mxu0 0.0
    %1282 = vmatpush1.msra.mxu0 0.0
    %1283 = vmatprep.subr.mxu0 0.0
    %1284 = vmatpush1.msra.mxu0 0.0
    %1285 = vmatprep.subr.mxu0 0.0
    %1286 = vmatpush1.msra.mxu0 0.0
    %1287 = vmatprep.subr.mxu0 0.0
    %1288 = vmatpush1.msra.mxu0 0.0
    %1289 = vmatprep.subr.mxu0 0.0
    %1290 = vmatpush1.msra.mxu0 0.0
    %1291 = vmatprep.subr.mxu0 0.0
    %1292 = vmatpush1.msra.mxu0 0.0
    %1293 = vmatprep.subr.mxu0 0.0
    %1294 = vmatpush1.msra.mxu0 0.0
    %1295 = vmatprep.subr.mxu0 0.0
    %1296 = vmatpush1.msra.mxu0 0.0
    %1297 = vmatprep.subr.mxu0 0.0
    %1298 = vmatpush1.msra.mxu0 0.0
    %1299 = vmatprep.subr.mxu0 0.0
    %1300 = vmatpush1.msra.mxu0 0.0
    %1301 = vmatprep.subr.mxu0 0.0
    %1302 = vmatpush1.msra.mxu0 0.0
    %1303 = vmatprep.subr.mxu0 0.0
    %1304 = vmatpush1.msra.mxu0 0.0
    %1305 = vmatprep.subr.mxu0 0.0
    %1306 = vmatpush1.msra.mxu0 0.0
    %1307 = vmatprep.subr.mxu0 0.0
    %1308 = vmatpush1.msra.mxu0 0.0
    %1309 = vmatprep.subr.mxu0 0.0
    %1310 = vmatpush1.msra.mxu0 %v1276
    %1311 = vmatprep.subr.mxu0 0.0
    %1312 = vmatpush1.msra.mxu0 %v1275
    %1313 = vmatprep.subr.mxu0 0.0
    %1314 = vmatpush2.msra.mxu0 0.0
    %1315 = vmatprep.subr.mxu0 0.0
    %1316 = vmatpush2.msra.mxu0 0.0
    %1317 = vmatprep.subr.mxu0 0.0
    %1318 = vmatpush2.msra.mxu0 0.0
    %1319 = vmatprep.subr.mxu0 0.0
    %1320 = vmatpush2.msra.mxu0 0.0
    %1321 = vmatprep.subr.mxu0 0.0
    %1322 = vmatpush2.msra.mxu0 0.0
    %1323 = vmatprep.subr.mxu0 0.0
    %1324 = vmatpush2.msra.mxu0 0.0
    %1325 = vmatprep.subr.mxu0 0.0
    %1326 = vmatpush2.msra.mxu0 0.0
    %1327 = vmatprep.subr.mxu0 0.0
    %1328 = vmatpush2.msra.mxu0 0.0
    %1329 = vmatprep.subr.mxu0 0.0
    %1330 = vmatpush2.msra.mxu0 0.0
    %1331 = vmatprep.subr.mxu0 0.0
    %1332 = vmatpush2.msra.mxu0 0.0
    %1333 = vmatprep.subr.mxu0 0.0
    %1334 = vmatpush2.msra.mxu0 0.0
    %1335 = vmatprep.subr.mxu0 0.0
    %1336 = vmatpush2.msra.mxu0 0.0
    %1337 = vmatprep.subr.mxu0 0.0
    %1338 = vmatpush2.msra.mxu0 0.0
    %1339 = vmatprep.subr.mxu0 0.0
    %1340 = vmatpush2.msra.mxu0 0.0
    %1341 = vmatprep.subr.mxu0 0.0
    %1342 = vmatpush2.msra.mxu0 0.0
    %1343 = vmatprep.subr.mxu0 0.0
    %1344 = vmatpush2.msra.mxu0 0.0
    %1345 = vmatprep.mubr.f32.mxu0 0.0
    %1346 = vmatmul.mubr.f32.gmra.mxu0 %v1279
    %v1347 = vpop.f32.mrf.mxu0
    %v1348 = vadd.f32 0.0, %v1347
    %v1349 = vpop.f32.mrf.mxu0
    %1350 = vdwg.mxu0
    %v1351 = vld [vmem:[%s431] sm:$0xff]
    %v1353 = vsel %vm357, %v1351, 0
    %1355 = vmatprep.subr.mxu0 0.0
    %1356 = vmatpush1.msra.mxu0 0.0
    %1357 = vmatprep.subr.mxu0 0.0
    %1358 = vmatpush1.msra.mxu0 0.0
    %1359 = vmatprep.subr.mxu0 0.0
    %1360 = vmatpush1.msra.mxu0 0.0
    %1361 = vmatprep.subr.mxu0 0.0
    %1362 = vmatpush1.msra.mxu0 0.0
    %1363 = vmatprep.subr.mxu0 0.0
    %1364 = vmatpush1.msra.mxu0 0.0
    %1365 = vmatprep.subr.mxu0 0.0
    %1366 = vmatpush1.msra.mxu0 0.0
    %1367 = vmatprep.subr.mxu0 0.0
    %1368 = vmatpush1.msra.mxu0 0.0
    %1369 = vmatprep.subr.mxu0 0.0
    %1370 = vmatpush1.msra.mxu0 0.0
    %1371 = vmatprep.subr.mxu0 0.0
    %1372 = vmatpush1.msra.mxu0 0.0
    %1373 = vmatprep.subr.mxu0 0.0
    %1374 = vmatpush1.msra.mxu0 0.0
    %1375 = vmatprep.subr.mxu0 0.0
    %1376 = vmatpush1.msra.mxu0 0.0
    %1377 = vmatprep.subr.mxu0 0.0
    %1378 = vmatpush1.msra.mxu0 0.0
    %1379 = vmatprep.subr.mxu0 0.0
    %1380 = vmatpush1.msra.mxu0 0.0
    %1381 = vmatprep.subr.mxu0 0.0
    %1382 = vmatpush1.msra.mxu0 0.0
    %1383 = vmatprep.subr.mxu0 0.0
    %1384 = vmatpush1.msra.mxu0 %v1276
    %1385 = vmatprep.subr.mxu0 0.0
    %1386 = vmatpush1.msra.mxu0 %v1275
    %1387 = vmatprep.subr.mxu0 0.0
    %1388 = vmatpush2.msra.mxu0 0.0
    %1389 = vmatprep.subr.mxu0 0.0
    %1390 = vmatpush2.msra.mxu0 0.0
    %1391 = vmatprep.subr.mxu0 0.0
    %1392 = vmatpush2.msra.mxu0 0.0
    %1393 = vmatprep.subr.mxu0 0.0
    %1394 = vmatpush2.msra.mxu0 0.0
    %1395 = vmatprep.subr.mxu0 0.0
    %1396 = vmatpush2.msra.mxu0 0.0
    %1397 = vmatprep.subr.mxu0 0.0
    %1398 = vmatpush2.msra.mxu0 0.0
    %1399 = vmatprep.subr.mxu0 0.0
    %1400 = vmatpush2.msra.mxu0 0.0
    %1401 = vmatprep.subr.mxu0 0.0
    %1402 = vmatpush2.msra.mxu0 0.0
    %1403 = vmatprep.subr.mxu0 0.0
    %1404 = vmatpush2.msra.mxu0 0.0
    %1405 = vmatprep.subr.mxu0 0.0
    %1406 = vmatpush2.msra.mxu0 0.0
    %1407 = vmatprep.subr.mxu0 0.0
    %1408 = vmatpush2.msra.mxu0 0.0
    %1409 = vmatprep.subr.mxu0 0.0
    %1410 = vmatpush2.msra.mxu0 0.0
    %1411 = vmatprep.subr.mxu0 0.0
    %1412 = vmatpush2.msra.mxu0 0.0
    %1413 = vmatprep.subr.mxu0 0.0
    %1414 = vmatpush2.msra.mxu0 0.0
    %1415 = vmatprep.subr.mxu0 0.0
    %1416 = vmatpush2.msra.mxu0 0.0
    %1417 = vmatprep.subr.mxu0 0.0
    %1418 = vmatpush2.msra.mxu0 0.0
    %1419 = vmatprep.mubr.f32.mxu0 0.0
    %1420 = vmatmul.mubr.f32.gmra.mxu0 %v1353
    %v1421 = vpop.f32.mrf.mxu0
    %v1422 = vadd.f32 0.0, %v1421
    %v1423 = vpop.f32.mrf.mxu0
    %1424 = vdwg.mxu0
    %v1425 = vmax.f32 %v1348, %v1422
    %1426 = vst.msk [vmem:[#allocation2] sm:$0x1] %vm507, 0.0
    %1427 = vst.msk [vmem:[#allocation2 + $0x9] sm:$0x1] %vm507, 0.0
    %1428 = vst.msk [vmem:[#allocation2 + $0x1] sm:$0xff] %vm68, %v1425
    %v1429 = vld [vmem:[#allocation2] sm:$0xff]
    %v1430 = vld [vmem:[#allocation2 + $0x8] sm:$0x3]
    %v1431 = vld [vmem:[%s4] sm:$0xff]
    %v1432 = vld [vmem:[%s4 + $0x8] sm:$0xff]
    %v1433 = vld [vmem:[%s4 + $0x10] sm:$0xff]
    %v1434 = vld [vmem:[%s4 + $0x18] sm:$0xff]
    %v1435 = vld [vmem:[%s4 + $0x20] sm:$0xff]
    %v1436 = vld [vmem:[%s4 + $0x28] sm:$0xff]
    %v1437 = vld [vmem:[%s4 + $0x30] sm:$0xff]
    %v1438 = vld [vmem:[%s4 + $0x38] sm:$0xff]
    %v1439 = vld [vmem:[%s521] sm:$0xff]
    %v1440 = vld [vmem:[%s521 + $0x8] sm:$0xff]
    %v1441 = vld [vmem:[%s521 + $0x10] sm:$0xff]
    %v1442 = vld [vmem:[%s521 + $0x18] sm:$0xff]
    %v1443 = vld [vmem:[%s521 + $0x20] sm:$0xff]
    %v1444 = vld [vmem:[%s521 + $0x28] sm:$0xff]
    %v1445 = vld [vmem:[%s521 + $0x30] sm:$0xff]
    %v1446 = vld [vmem:[%s521 + $0x38] sm:$0xff]
    %v1449 = vrot.slane %v1429, 1
    %v1450 = vrot.slane %v1430, 1
    %v1451 = vsel %vm62, %v1449, %v1450
    %v1452 = vsel %vm68, %v1451, 0
    %1454 = vmatprep.subr.mxu0 0.0
    %1455 = vmatpush1.msra.mxu0 0.0
    %1456 = vmatprep.subr.mxu0 0.0
    %1457 = vmatpush1.msra.mxu0 0.0
    %1458 = vmatprep.subr.mxu0 0.0
    %1459 = vmatpush1.msra.mxu0 0.0
    %1460 = vmatprep.subr.mxu0 0.0
    %1461 = vmatpush1.msra.mxu0 0.0
    %1462 = vmatprep.subr.mxu0 0.0
    %1463 = vmatpush1.msra.mxu0 0.0
    %1464 = vmatprep.subr.mxu0 0.0
    %1465 = vmatpush1.msra.mxu0 0.0
    %1466 = vmatprep.subr.mxu0 0.0
    %1467 = vmatpush1.msra.mxu0 0.0
    %1468 = vmatprep.subr.mxu0 0.0
    %1469 = vmatpush1.msra.mxu0 0.0
    %1470 = vmatprep.subr.mxu0 0.0
    %1471 = vmatpush1.msra.mxu0 %v1446
    %1472 = vmatprep.subr.mxu0 0.0
    %1473 = vmatpush1.msra.mxu0 %v1445
    %1474 = vmatprep.subr.mxu0 0.0
    %1475 = vmatpush1.msra.mxu0 %v1444
    %1476 = vmatprep.subr.mxu0 0.0
    %1477 = vmatpush1.msra.mxu0 %v1443
    %1478 = vmatprep.subr.mxu0 0.0
    %1479 = vmatpush1.msra.mxu0 %v1442
    %1480 = vmatprep.subr.mxu0 0.0
    %1481 = vmatpush1.msra.mxu0 %v1441
    %1482 = vmatprep.subr.mxu0 0.0
    %1483 = vmatpush1.msra.mxu0 %v1440
    %1484 = vmatprep.subr.mxu0 0.0
    %1485 = vmatpush1.msra.mxu0 %v1439
    %1486 = vmatprep.subr.mxu0 0.0
    %1487 = vmatpush2.msra.mxu0 0.0
    %1488 = vmatprep.subr.mxu0 0.0
    %1489 = vmatpush2.msra.mxu0 0.0
    %1490 = vmatprep.subr.mxu0 0.0
    %1491 = vmatpush2.msra.mxu0 0.0
    %1492 = vmatprep.subr.mxu0 0.0
    %1493 = vmatpush2.msra.mxu0 0.0
    %1494 = vmatprep.subr.mxu0 0.0
    %1495 = vmatpush2.msra.mxu0 0.0
    %1496 = vmatprep.subr.mxu0 0.0
    %1497 = vmatpush2.msra.mxu0 0.0
    %1498 = vmatprep.subr.mxu0 0.0
    %1499 = vmatpush2.msra.mxu0 0.0
    %1500 = vmatprep.subr.mxu0 0.0
    %1501 = vmatpush2.msra.mxu0 0.0
    %1502 = vmatprep.subr.mxu0 0.0
    %1503 = vmatpush2.msra.mxu0 0.0
    %1504 = vmatprep.subr.mxu0 0.0
    %1505 = vmatpush2.msra.mxu0 0.0
    %1506 = vmatprep.subr.mxu0 0.0
    %1507 = vmatpush2.msra.mxu0 0.0
    %1508 = vmatprep.subr.mxu0 0.0
    %1509 = vmatpush2.msra.mxu0 0.0
    %1510 = vmatprep.subr.mxu0 0.0
    %1511 = vmatpush2.msra.mxu0 0.0
    %1512 = vmatprep.subr.mxu0 0.0
    %1513 = vmatpush2.msra.mxu0 0.0
    %1514 = vmatprep.subr.mxu0 0.0
    %1515 = vmatpush2.msra.mxu0 0.0
    %1516 = vmatprep.subr.mxu0 0.0
    %1517 = vmatpush2.msra.mxu0 0.0
    %1518 = vmatprep.mubr.f32.mxu0 0.0
    %1519 = vmatmul.mubr.f32.gmra.mxu0 %v1452
    %v1520 = vpop.f32.mrf.mxu0
    %v1521 = vadd.f32 0.0, %v1520
    %v1522 = vpop.f32.mrf.mxu0
    %1523 = vdwg.mxu0
    %v1524 = vsel %vm68, %v1429, 0
    %1526 = vmatprep.subr.mxu0 0.0
    %1527 = vmatpush1.msra.mxu0 0.0
    %1528 = vmatprep.subr.mxu0 0.0
    %1529 = vmatpush1.msra.mxu0 0.0
    %1530 = vmatprep.subr.mxu0 0.0
    %1531 = vmatpush1.msra.mxu0 0.0
    %1532 = vmatprep.subr.mxu0 0.0
    %1533 = vmatpush1.msra.mxu0 0.0
    %1534 = vmatprep.subr.mxu0 0.0
    %1535 = vmatpush1.msra.mxu0 0.0
    %1536 = vmatprep.subr.mxu0 0.0
    %1537 = vmatpush1.msra.mxu0 0.0
    %1538 = vmatprep.subr.mxu0 0.0
    %1539 = vmatpush1.msra.mxu0 0.0
    %1540 = vmatprep.subr.mxu0 0.0
    %1541 = vmatpush1.msra.mxu0 0.0
    %1542 = vmatprep.subr.mxu0 0.0
    %1543 = vmatpush1.msra.mxu0 %v1438
    %1544 = vmatprep.subr.mxu0 0.0
    %1545 = vmatpush1.msra.mxu0 %v1437
    %1546 = vmatprep.subr.mxu0 0.0
    %1547 = vmatpush1.msra.mxu0 %v1436
    %1548 = vmatprep.subr.mxu0 0.0
    %1549 = vmatpush1.msra.mxu0 %v1435
    %1550 = vmatprep.subr.mxu0 0.0
    %1551 = vmatpush1.msra.mxu0 %v1434
    %1552 = vmatprep.subr.mxu0 0.0
    %1553 = vmatpush1.msra.mxu0 %v1433
    %1554 = vmatprep.subr.mxu0 0.0
    %1555 = vmatpush1.msra.mxu0 %v1432
    %1556 = vmatprep.subr.mxu0 0.0
    %1557 = vmatpush1.msra.mxu0 %v1431
    %1558 = vmatprep.subr.mxu0 0.0
    %1559 = vmatpush2.msra.mxu0 0.0
    %1560 = vmatprep.subr.mxu0 0.0
    %1561 = vmatpush2.msra.mxu0 0.0
    %1562 = vmatprep.subr.mxu0 0.0
    %1563 = vmatpush2.msra.mxu0 0.0
    %1564 = vmatprep.subr.mxu0 0.0
    %1565 = vmatpush2.msra.mxu0 0.0
    %1566 = vmatprep.subr.mxu0 0.0
    %1567 = vmatpush2.msra.mxu0 0.0
    %1568 = vmatprep.subr.mxu0 0.0
    %1569 = vmatpush2.msra.mxu0 0.0
    %1570 = vmatprep.subr.mxu0 0.0
    %1571 = vmatpush2.msra.mxu0 0.0
    %1572 = vmatprep.subr.mxu0 0.0
    %1573 = vmatpush2.msra.mxu0 0.0
    %1574 = vmatprep.subr.mxu0 0.0
    %1575 = vmatpush2.msra.mxu0 0.0
    %1576 = vmatprep.subr.mxu0 0.0
    %1577 = vmatpush2.msra.mxu0 0.0
    %1578 = vmatprep.subr.mxu0 0.0
    %1579 = vmatpush2.msra.mxu0 0.0
    %1580 = vmatprep.subr.mxu0 0.0
    %1581 = vmatpush2.msra.mxu0 0.0
    %1582 = vmatprep.subr.mxu0 0.0
    %1583 = vmatpush2.msra.mxu0 0.0
    %1584 = vmatprep.subr.mxu0 0.0
    %1585 = vmatpush2.msra.mxu0 0.0
    %1586 = vmatprep.subr.mxu0 0.0
    %1587 = vmatpush2.msra.mxu0 0.0
    %1588 = vmatprep.subr.mxu0 0.0
    %1589 = vmatpush2.msra.mxu0 0.0
    %1590 = vmatprep.mubr.f32.mxu0 0.0
    %1591 = vmatmul.mubr.f32.gmra.mxu0 %v1524
    %v1592 = vpop.f32.mrf.mxu0
    %v1593 = vadd.f32 %v1521, %v1592
    %v1594 = vpop.f32.mrf.mxu0
    %1595 = vdwg.mxu0
    %v1596 = vld [vmem:[%s679] sm:$0xff]
    %v1597 = vld [vmem:[%s679 + $0x8] sm:$0xff]
    %v1598 = vld [vmem:[%s679 + $0x10] sm:$0xff]
    %v1599 = vld [vmem:[%s679 + $0x18] sm:$0xff]
    %v1600 = vld [vmem:[%s679 + $0x20] sm:$0xff]
    %v1601 = vld [vmem:[%s679 + $0x28] sm:$0xff]
    %v1602 = vld [vmem:[%s679 + $0x30] sm:$0xff]
    %v1603 = vld [vmem:[%s679 + $0x38] sm:$0xff]
    %v1604 = vrot.slane %v1429, 2
    %v1605 = vrot.slane %v1430, 2
    %v1606 = vsel %vm236, %v1604, %v1605
    %v1607 = vsel %vm68, %v1606, 0
    %1609 = vmatprep.subr.mxu0 0.0
    %1610 = vmatpush1.msra.mxu0 0.0
    %1611 = vmatprep.subr.mxu0 0.0
    %1612 = vmatpush1.msra.mxu0 0.0
    %1613 = vmatprep.subr.mxu0 0.0
    %1614 = vmatpush1.msra.mxu0 0.0
    %1615 = vmatprep.subr.mxu0 0.0
    %1616 = vmatpush1.msra.mxu0 0.0
    %1617 = vmatprep.subr.mxu0 0.0
    %1618 = vmatpush1.msra.mxu0 0.0
    %1619 = vmatprep.subr.mxu0 0.0
    %1620 = vmatpush1.msra.mxu0 0.0
    %1621 = vmatprep.subr.mxu0 0.0
    %1622 = vmatpush1.msra.mxu0 0.0
    %1623 = vmatprep.subr.mxu0 0.0
    %1624 = vmatpush1.msra.mxu0 0.0
    %1625 = vmatprep.subr.mxu0 0.0
    %1626 = vmatpush1.msra.mxu0 %v1603
    %1627 = vmatprep.subr.mxu0 0.0
    %1628 = vmatpush1.msra.mxu0 %v1602
    %1629 = vmatprep.subr.mxu0 0.0
    %1630 = vmatpush1.msra.mxu0 %v1601
    %1631 = vmatprep.subr.mxu0 0.0
    %1632 = vmatpush1.msra.mxu0 %v1600
    %1633 = vmatprep.subr.mxu0 0.0
    %1634 = vmatpush1.msra.mxu0 %v1599
    %1635 = vmatprep.subr.mxu0 0.0
    %1636 = vmatpush1.msra.mxu0 %v1598
    %1637 = vmatprep.subr.mxu0 0.0
    %1638 = vmatpush1.msra.mxu0 %v1597
    %1639 = vmatprep.subr.mxu0 0.0
    %1640 = vmatpush1.msra.mxu0 %v1596
    %1641 = vmatprep.subr.mxu0 0.0
    %1642 = vmatpush2.msra.mxu0 0.0
    %1643 = vmatprep.subr.mxu0 0.0
    %1644 = vmatpush2.msra.mxu0 0.0
    %1645 = vmatprep.subr.mxu0 0.0
    %1646 = vmatpush2.msra.mxu0 0.0
    %1647 = vmatprep.subr.mxu0 0.0
    %1648 = vmatpush2.msra.mxu0 0.0
    %1649 = vmatprep.subr.mxu0 0.0
    %1650 = vmatpush2.msra.mxu0 0.0
    %1651 = vmatprep.subr.mxu0 0.0
    %1652 = vmatpush2.msra.mxu0 0.0
    %1653 = vmatprep.subr.mxu0 0.0
    %1654 = vmatpush2.msra.mxu0 0.0
    %1655 = vmatprep.subr.mxu0 0.0
    %1656 = vmatpush2.msra.mxu0 0.0
    %1657 = vmatprep.subr.mxu0 0.0
    %1658 = vmatpush2.msra.mxu0 0.0
    %1659 = vmatprep.subr.mxu0 0.0
    %1660 = vmatpush2.msra.mxu0 0.0
    %1661 = vmatprep.subr.mxu0 0.0
    %1662 = vmatpush2.msra.mxu0 0.0
    %1663 = vmatprep.subr.mxu0 0.0
    %1664 = vmatpush2.msra.mxu0 0.0
    %1665 = vmatprep.subr.mxu0 0.0
    %1666 = vmatpush2.msra.mxu0 0.0
    %1667 = vmatprep.subr.mxu0 0.0
    %1668 = vmatpush2.msra.mxu0 0.0
    %1669 = vmatprep.subr.mxu0 0.0
    %1670 = vmatpush2.msra.mxu0 0.0
    %1671 = vmatprep.subr.mxu0 0.0
    %1672 = vmatpush2.msra.mxu0 0.0
    %1673 = vmatprep.mubr.f32.mxu0 0.0
    %1674 = vmatmul.mubr.f32.gmra.mxu0 %v1607
    %v1675 = vpop.f32.mrf.mxu0
    %v1676 = vadd.f32 0.0, %v1675
    %v1677 = vpop.f32.mrf.mxu0
    %1678 = vdwg.mxu0
    %v1679 = vadd.f32 %v1593, %v1676
    %v1680 = vld [vmem:[%s5] sm:$0x1]
    %v1681 = vlaneseq
    %v1682 = vshrl.u32 %v1681, 7
    %v1683 = vsub.s32 0, %v1682
    %v1684 = vrot.slane %v1680, %v1683
    %v1685 = vadd.f32 %v1679, %v1684
    %v1686 = vmax.f32 %v1685, 0.0
    %v1687 = vld [vmem:[%s5 + $0x1] sm:$0x1]
    %v1688 = vlaneseq
    %v1689 = vshrl.u32 %v1688, 7
    %v1690 = vsub.s32 0, %v1689
    %v1691 = vrot.slane %v1687, %v1690
    %v1692 = vmul.f32 %v1686, %v1691
    %v1693 = vld [vmem:[%s5 + $0x2] sm:$0x1]
    %v1694 = vlaneseq
    %v1695 = vshrl.u32 %v1694, 7
    %v1696 = vsub.s32 0, %v1695
    %v1697 = vrot.slane %v1693, %v1696
    %v1698 = vadd.f32 %v1692, %v1697
    %1700 = vrot.lane.b32.xlu0 %v1698, 64
    %v1701 = vpop.permute.xlu0 %1700
    %v1703 = vmax.f32 %v1698, %v1701
    %v1704 = vld [vmem:[%s6] sm:$0xf]
    %v1706 = vsel %vm789, %v1704, 0
    %1708 = vmatprep.subr.mxu0 0.0
    %1709 = vmatpush1.msra.mxu0 0.0
    %1710 = vmatprep.subr.mxu0 0.0
    %1711 = vmatpush1.msra.mxu0 0.0
    %1712 = vmatprep.subr.mxu0 0.0
    %1713 = vmatpush1.msra.mxu0 0.0
    %1714 = vmatprep.subr.mxu0 0.0
    %1715 = vmatpush1.msra.mxu0 0.0
    %1716 = vmatprep.subr.mxu0 0.0
    %1717 = vmatpush1.msra.mxu0 0.0
    %1718 = vmatprep.subr.mxu0 0.0
    %1719 = vmatpush1.msra.mxu0 0.0
    %1720 = vmatprep.subr.mxu0 0.0
    %1721 = vmatpush1.msra.mxu0 0.0
    %1722 = vmatprep.subr.mxu0 0.0
    %1723 = vmatpush1.msra.mxu0 0.0
    %1724 = vmatprep.subr.mxu0 0.0
    %1725 = vmatpush1.msra.mxu0 0.0
    %1726 = vmatprep.subr.mxu0 0.0
    %1727 = vmatpush1.msra.mxu0 0.0
    %1728 = vmatprep.subr.mxu0 0.0
    %1729 = vmatpush1.msra.mxu0 0.0
    %1730 = vmatprep.subr.mxu0 0.0
    %1731 = vmatpush1.msra.mxu0 0.0
    %1732 = vmatprep.subr.mxu0 0.0
    %1733 = vmatpush1.msra.mxu0 0.0
    %1734 = vmatprep.subr.mxu0 0.0
    %1735 = vmatpush1.msra.mxu0 0.0
    %1736 = vmatprep.subr.mxu0 0.0
    %1737 = vmatpush1.msra.mxu0 0.0
    %1738 = vmatprep.subr.mxu0 0.0
    %1739 = vmatpush1.msra.mxu0 %v1703
    %1740 = vmatprep.subr.mxu0 0.0
    %1741 = vmatpush2.msra.mxu0 0.0
    %1742 = vmatprep.subr.mxu0 0.0
    %1743 = vmatpush2.msra.mxu0 0.0
    %1744 = vmatprep.subr.mxu0 0.0
    %1745 = vmatpush2.msra.mxu0 0.0
    %1746 = vmatprep.subr.mxu0 0.0
    %1747 = vmatpush2.msra.mxu0 0.0
    %1748 = vmatprep.subr.mxu0 0.0
    %1749 = vmatpush2.msra.mxu0 0.0
    %1750 = vmatprep.subr.mxu0 0.0
    %1751 = vmatpush2.msra.mxu0 0.0
    %1752 = vmatprep.subr.mxu0 0.0
    %1753 = vmatpush2.msra.mxu0 0.0
    %1754 = vmatprep.subr.mxu0 0.0
    %1755 = vmatpush2.msra.mxu0 0.0
    %1756 = vmatprep.subr.mxu0 0.0
    %1757 = vmatpush2.msra.mxu0 0.0
    %1758 = vmatprep.subr.mxu0 0.0
    %1759 = vmatpush2.msra.mxu0 0.0
    %1760 = vmatprep.subr.mxu0 0.0
    %1761 = vmatpush2.msra.mxu0 0.0
    %1762 = vmatprep.subr.mxu0 0.0
    %1763 = vmatpush2.msra.mxu0 0.0
    %1764 = vmatprep.subr.mxu0 0.0
    %1765 = vmatpush2.msra.mxu0 0.0
    %1766 = vmatprep.subr.mxu0 0.0
    %1767 = vmatpush2.msra.mxu0 0.0
    %1768 = vmatprep.subr.mxu0 0.0
    %1769 = vmatpush2.msra.mxu0 0.0
    %1770 = vmatprep.subr.mxu0 0.0
    %1771 = vmatpush2.msra.mxu0 0.0
    %1772 = vmatprep.mubr.f32.mxu0 0.0
    %1773 = vmatmul.mubr.f32.gmra.mxu0 %v1706
    %v1774 = vpop.f32.mrf.mxu0
    %v1775 = vadd.f32 0.0, %v1774
    %v1776 = vpop.f32.mrf.mxu0
    %1777 = vdwg.mxu0
    %v1778 = vld [vmem:[%s863] sm:$0xf]
    %v1780 = vsel %vm789, %v1778, 0
    %1782 = vmatprep.subr.mxu0 0.0
    %1783 = vmatpush1.msra.mxu0 0.0
    %1784 = vmatprep.subr.mxu0 0.0
    %1785 = vmatpush1.msra.mxu0 0.0
    %1786 = vmatprep.subr.mxu0 0.0
    %1787 = vmatpush1.msra.mxu0 0.0
    %1788 = vmatprep.subr.mxu0 0.0
    %1789 = vmatpush1.msra.mxu0 0.0
    %1790 = vmatprep.subr.mxu0 0.0
    %1791 = vmatpush1.msra.mxu0 0.0
    %1792 = vmatprep.subr.mxu0 0.0
    %1793 = vmatpush1.msra.mxu0 0.0
    %1794 = vmatprep.subr.mxu0 0.0
    %1795 = vmatpush1.msra.mxu0 0.0
    %1796 = vmatprep.subr.mxu0 0.0
    %1797 = vmatpush1.msra.mxu0 0.0
    %1798 = vmatprep.subr.mxu0 0.0
    %1799 = vmatpush1.msra.mxu0 0.0
    %1800 = vmatprep.subr.mxu0 0.0
    %1801 = vmatpush1.msra.mxu0 0.0
    %1802 = vmatprep.subr.mxu0 0.0
    %1803 = vmatpush1.msra.mxu0 0.0
    %1804 = vmatprep.subr.mxu0 0.0
    %1805 = vmatpush1.msra.mxu0 0.0
    %1806 = vmatprep.subr.mxu0 0.0
    %1807 = vmatpush1.msra.mxu0 0.0
    %1808 = vmatprep.subr.mxu0 0.0
    %1809 = vmatpush1.msra.mxu0 0.0
    %1810 = vmatprep.subr.mxu0 0.0
    %1811 = vmatpush1.msra.mxu0 0.0
    %1812 = vmatprep.subr.mxu0 0.0
    %1813 = vmatpush1.msra.mxu0 %v1703
    %1814 = vmatprep.subr.mxu0 0.0
    %1815 = vmatpush2.msra.mxu0 0.0
    %1816 = vmatprep.subr.mxu0 0.0
    %1817 = vmatpush2.msra.mxu0 0.0
    %1818 = vmatprep.subr.mxu0 0.0
    %1819 = vmatpush2.msra.mxu0 0.0
    %1820 = vmatprep.subr.mxu0 0.0
    %1821 = vmatpush2.msra.mxu0 0.0
    %1822 = vmatprep.subr.mxu0 0.0
    %1823 = vmatpush2.msra.mxu0 0.0
    %1824 = vmatprep.subr.mxu0 0.0
    %1825 = vmatpush2.msra.mxu0 0.0
    %1826 = vmatprep.subr.mxu0 0.0
    %1827 = vmatpush2.msra.mxu0 0.0
    %1828 = vmatprep.subr.mxu0 0.0
    %1829 = vmatpush2.msra.mxu0 0.0
    %1830 = vmatprep.subr.mxu0 0.0
    %1831 = vmatpush2.msra.mxu0 0.0
    %1832 = vmatprep.subr.mxu0 0.0
    %1833 = vmatpush2.msra.mxu0 0.0
    %1834 = vmatprep.subr.mxu0 0.0
    %1835 = vmatpush2.msra.mxu0 0.0
    %1836 = vmatprep.subr.mxu0 0.0
    %1837 = vmatpush2.msra.mxu0 0.0
    %1838 = vmatprep.subr.mxu0 0.0
    %1839 = vmatpush2.msra.mxu0 0.0
    %1840 = vmatprep.subr.mxu0 0.0
    %1841 = vmatpush2.msra.mxu0 0.0
    %1842 = vmatprep.subr.mxu0 0.0
    %1843 = vmatpush2.msra.mxu0 0.0
    %1844 = vmatprep.subr.mxu0 0.0
    %1845 = vmatpush2.msra.mxu0 0.0
    %1846 = vmatprep.mubr.f32.mxu0 0.0
    %1847 = vmatmul.mubr.f32.gmra.mxu0 %v1780
    %v1848 = vpop.f32.mrf.mxu0
    %v1849 = vadd.f32 0.0, %v1848
    %v1850 = vpop.f32.mrf.mxu0
    %1851 = vdwg.mxu0
    %v1852 = vmax.f32 %v1775, %v1849
    %1853 = vst.msk [vmem:[#allocation3 + $0x1] sm:$0x1] %vm507, %v1852
    %v1856 = vunpack.c.l.s4 1983009808
    %v1857 = vunpack.c.0.s8 %v1856
    %v1858 = vlaneseq
    %v1859 = vshrl.u32 %v1858, 7
    %v1860 = vsub.s32 %v1857, %v1859
    %v1861 = vrot.slane %v1852, %v1860
    %v1862 = vrot.slane %v1861, 7
    %v1863 = vrot.slane %v1862, 2
    %1864 = vrot.lane.b32.xlu0 %v1863, 64
    %v1865 = vpop.permute.xlu0 %1864
    %1867 = vst.msk [vmem:[#allocation3 + $0x1] sm:$0x1] %vm953, %v1865
    %v1868 = vcombine.high %v1861, %v1861
    %1870 = vst.msk [vmem:[#allocation3 + $0x3] sm:$0x1] %vm507, %v1868
    %v1871 = vrot.slane %v1868, 7
    %v1872 = vrot.slane %v1871, 2
    %1873 = vrot.lane.b32.xlu0 %v1872, 64
    %v1874 = vpop.permute.xlu0 %1873
    %1876 = vst.msk [vmem:[#allocation3 + $0x3] sm:$0x1] %vm953, %v1874
    %v1877 = vld [vmem:[#allocation3] sm:$0xf]
    %v1878 = vld [vmem:[%s7] sm:$0xff]
    %v1879 = vld [vmem:[%s7 + $0x8] sm:$0xff]
    %v1880 = vld [vmem:[%s7 + $0x10] sm:$0xff]
    %v1881 = vld [vmem:[%s7 + $0x18] sm:$0xff]
    %v1882 = vld [vmem:[%s7 + $0x20] sm:$0xff]
    %v1883 = vld [vmem:[%s7 + $0x28] sm:$0xff]
    %v1884 = vld [vmem:[%s7 + $0x30] sm:$0xff]
    %v1885 = vld [vmem:[%s7 + $0x38] sm:$0xff]
    %v1886 = vld [vmem:[%s7 + $0x40] sm:$0xff]
    %v1887 = vld [vmem:[%s7 + $0x48] sm:$0xff]
    %v1888 = vld [vmem:[%s7 + $0x50] sm:$0xff]
    %v1889 = vld [vmem:[%s7 + $0x58] sm:$0xff]
    %v1890 = vld [vmem:[%s7 + $0x60] sm:$0xff]
    %v1891 = vld [vmem:[%s7 + $0x68] sm:$0xff]
    %v1892 = vld [vmem:[%s7 + $0x70] sm:$0xff]
    %v1893 = vld [vmem:[%s7 + $0x78] sm:$0xff]
    %v1894 = vld [vmem:[%s7 + $0x80] sm:$0xff]
    %v1895 = vld [vmem:[%s7 + $0x88] sm:$0xff]
    %v1896 = vld [vmem:[%s7 + $0x90] sm:$0xff]
    %v1897 = vld [vmem:[%s7 + $0x98] sm:$0xff]
    %v1898 = vld [vmem:[%s7 + $0xa0] sm:$0xff]
    %v1899 = vld [vmem:[%s7 + $0xa8] sm:$0xff]
    %v1900 = vld [vmem:[%s7 + $0xb0] sm:$0xff]
    %v1901 = vld [vmem:[%s7 + $0xb8] sm:$0xff]
    %v1902 = vld [vmem:[%s7 + $0xc0] sm:$0xff]
    %v1903 = vld [vmem:[%s7 + $0xc8] sm:$0xff]
    %v1904 = vld [vmem:[%s7 + $0xd0] sm:$0xff]
    %v1905 = vld [vmem:[%s7 + $0xd8] sm:$0xff]
    %v1906 = vld [vmem:[%s7 + $0xe0] sm:$0xff]
    %v1907 = vld [vmem:[%s7 + $0xe8] sm:$0xff]
    %v1908 = vld [vmem:[%s7 + $0xf0] sm:$0xff]
    %v1909 = vld [vmem:[%s7 + $0xf8] sm:$0xff]
    %v1910 = vld [vmem:[%s8] sm:$0x1]
    %v1912 = vlaneseq
    %v1913 = vshrl.u32 %v1912, 7
    %v1914 = vsub.s32 0, %v1913
    %v1915 = vrot.slane %v1910, %v1914
    %v1919 = vunpack.c.l.s4 1983009808
    %v1920 = vunpack.c.0.s8 %v1919
    %v1921 = vlaneseq
    %v1922 = vshrl.u32 %v1921, 7
    %v1923 = vsub.s32 %v1920, %v1922
    %v1924 = vrot.slane %v1877, %v1923
    %v1925 = vcombine.high %v1924, %v1924
    %1928 = vmatprep.subr.mxu0 0.0
    %1929 = vmatpush1.msra.mxu0 %v1893
    %1930 = vmatprep.subr.mxu0 0.0
    %1931 = vmatpush1.msra.mxu0 %v1892
    %1932 = vmatprep.subr.mxu0 0.0
    %1933 = vmatpush1.msra.mxu0 %v1891
    %1934 = vmatprep.subr.mxu0 0.0
    %1935 = vmatpush1.msra.mxu0 %v1890
    %1936 = vmatprep.subr.mxu0 0.0
    %1937 = vmatpush1.msra.mxu0 %v1889
    %1938 = vmatprep.subr.mxu0 0.0
    %1939 = vmatpush1.msra.mxu0 %v1888
    %1940 = vmatprep.subr.mxu0 0.0
    %1941 = vmatpush1.msra.mxu0 %v1887
    %1942 = vmatprep.subr.mxu0 0.0
    %1943 = vmatpush1.msra.mxu0 %v1886
    %1944 = vmatprep.subr.mxu0 0.0
    %1945 = vmatpush1.msra.mxu0 %v1885
    %1946 = vmatprep.subr.mxu0 0.0
    %1947 = vmatpush1.msra.mxu0 %v1884
    %1948 = vmatprep.subr.mxu0 0.0
    %1949 = vmatpush1.msra.mxu0 %v1883
    %1950 = vmatprep.subr.mxu0 0.0
    %1951 = vmatpush1.msra.mxu0 %v1882
    %1952 = vmatprep.subr.mxu0 0.0
    %1953 = vmatpush1.msra.mxu0 %v1881
    %1954 = vmatprep.subr.mxu0 0.0
    %1955 = vmatpush1.msra.mxu0 %v1880
    %1956 = vmatprep.subr.mxu0 0.0
    %1957 = vmatpush1.msra.mxu0 %v1879
    %1958 = vmatprep.subr.mxu0 0.0
    %1959 = vmatpush1.msra.mxu0 %v1878
    %1960 = vmatprep.subr.mxu0 0.0
    %1961 = vmatpush2.msra.mxu0 %v1909
    %1962 = vmatprep.subr.mxu0 0.0
    %1963 = vmatpush2.msra.mxu0 %v1908
    %1964 = vmatprep.subr.mxu0 0.0
    %1965 = vmatpush2.msra.mxu0 %v1907
    %1966 = vmatprep.subr.mxu0 0.0
    %1967 = vmatpush2.msra.mxu0 %v1906
    %1968 = vmatprep.subr.mxu0 0.0
    %1969 = vmatpush2.msra.mxu0 %v1905
    %1970 = vmatprep.subr.mxu0 0.0
    %1971 = vmatpush2.msra.mxu0 %v1904
    %1972 = vmatprep.subr.mxu0 0.0
    %1973 = vmatpush2.msra.mxu0 %v1903
    %1974 = vmatprep.subr.mxu0 0.0
    %1975 = vmatpush2.msra.mxu0 %v1902
    %1976 = vmatprep.subr.mxu0 0.0
    %1977 = vmatpush2.msra.mxu0 %v1901
    %1978 = vmatprep.subr.mxu0 0.0
    %1979 = vmatpush2.msra.mxu0 %v1900
    %1980 = vmatprep.subr.mxu0 0.0
    %1981 = vmatpush2.msra.mxu0 %v1899
    %1982 = vmatprep.subr.mxu0 0.0
    %1983 = vmatpush2.msra.mxu0 %v1898
    %1984 = vmatprep.subr.mxu0 0.0
    %1985 = vmatpush2.msra.mxu0 %v1897
    %1986 = vmatprep.subr.mxu0 0.0
    %1987 = vmatpush2.msra.mxu0 %v1896
    %1988 = vmatprep.subr.mxu0 0.0
    %1989 = vmatpush2.msra.mxu0 %v1895
    %1990 = vmatprep.subr.mxu0 0.0
    %1991 = vmatpush2.msra.mxu0 %v1894
    %1992 = vmatprep.mubr.f32.mxu0 %v1925
    %1993 = vmatmul.mubr.f32.gmra.mxu0 %v1924
    %v1994 = vpop.f32.mrf.mxu0
    %v1995 = vadd.f32 %v1915, %v1994
    %v1996 = vpop.f32.mrf.mxu0
    %1997 = vdwg.mxu0
    %v1998 = vmax.f32 %v1995, 0.0
    %v1999 = vld [vmem:[%s9] sm:$0xff]
    %v2000 = vld [vmem:[%s9 + $0x8] sm:$0xff]
    %v2001 = vld [vmem:[%s9 + $0x10] sm:$0xff]
    %v2002 = vld [vmem:[%s9 + $0x18] sm:$0xff]
    %v2003 = vld [vmem:[%s10] sm:$0x1]
    %v2005 = vlaneseq
    %v2006 = vshrl.u32 %v2005, 7
    %v2007 = vsub.s32 0, %v2006
    %v2008 = vrot.slane %v2003, %v2007
    %vm2010 = vcmask 261120
    %v2012 = vsel %vm2010, %v1998, 0
    %2014 = vmatprep.subr.mxu0 0.0
    %2015 = vmatpush1.msra.mxu0 0.0
    %2016 = vmatprep.subr.mxu0 0.0
    %2017 = vmatpush1.msra.mxu0 0.0
    %2018 = vmatprep.subr.mxu0 0.0
    %2019 = vmatpush1.msra.mxu0 0.0
    %2020 = vmatprep.subr.mxu0 0.0
    %2021 = vmatpush1.msra.mxu0 0.0
    %2022 = vmatprep.subr.mxu0 0.0
    %2023 = vmatpush1.msra.mxu0 0.0
    %2024 = vmatprep.subr.mxu0 0.0
    %2025 = vmatpush1.msra.mxu0 0.0
    %2026 = vmatprep.subr.mxu0 0.0
    %2027 = vmatpush1.msra.mxu0 0.0
    %2028 = vmatprep.subr.mxu0 0.0
    %2029 = vmatpush1.msra.mxu0 0.0
    %2030 = vmatprep.subr.mxu0 0.0
    %2031 = vmatpush1.msra.mxu0 0.0
    %2032 = vmatprep.subr.mxu0 0.0
    %2033 = vmatpush1.msra.mxu0 0.0
    %2034 = vmatprep.subr.mxu0 0.0
    %2035 = vmatpush1.msra.mxu0 0.0
    %2036 = vmatprep.subr.mxu0 0.0
    %2037 = vmatpush1.msra.mxu0 0.0
    %2038 = vmatprep.subr.mxu0 0.0
    %2039 = vmatpush1.msra.mxu0 %v2002
    %2040 = vmatprep.subr.mxu0 0.0
    %2041 = vmatpush1.msra.mxu0 %v2001
    %2042 = vmatprep.subr.mxu0 0.0
    %2043 = vmatpush1.msra.mxu0 %v2000
    %2044 = vmatprep.subr.mxu0 0.0
    %2045 = vmatpush1.msra.mxu0 %v1999
    %2046 = vmatprep.subr.mxu0 0.0
    %2047 = vmatpush2.msra.mxu0 0.0
    %2048 = vmatprep.subr.mxu0 0.0
    %2049 = vmatpush2.msra.mxu0 0.0
    %2050 = vmatprep.subr.mxu0 0.0
    %2051 = vmatpush2.msra.mxu0 0.0
    %2052 = vmatprep.subr.mxu0 0.0
    %2053 = vmatpush2.msra.mxu0 0.0
    %2054 = vmatprep.subr.mxu0 0.0
    %2055 = vmatpush2.msra.mxu0 0.0
    %2056 = vmatprep.subr.mxu0 0.0
    %2057 = vmatpush2.msra.mxu0 0.0
    %2058 = vmatprep.subr.mxu0 0.0
    %2059 = vmatpush2.msra.mxu0 0.0
    %2060 = vmatprep.subr.mxu0 0.0
    %2061 = vmatpush2.msra.mxu0 0.0
    %2062 = vmatprep.subr.mxu0 0.0
    %2063 = vmatpush2.msra.mxu0 0.0
    %2064 = vmatprep.subr.mxu0 0.0
    %2065 = vmatpush2.msra.mxu0 0.0
    %2066 = vmatprep.subr.mxu0 0.0
    %2067 = vmatpush2.msra.mxu0 0.0
    %2068 = vmatprep.subr.mxu0 0.0
    %2069 = vmatpush2.msra.mxu0 0.0
    %2070 = vmatprep.subr.mxu0 0.0
    %2071 = vmatpush2.msra.mxu0 0.0
    %2072 = vmatprep.subr.mxu0 0.0
    %2073 = vmatpush2.msra.mxu0 0.0
    %2074 = vmatprep.subr.mxu0 0.0
    %2075 = vmatpush2.msra.mxu0 0.0
    %2076 = vmatprep.subr.mxu0 0.0
    %2077 = vmatpush2.msra.mxu0 0.0
    %2078 = vmatprep.mubr.f32.mxu0 0.0
    %2079 = vmatmul.mubr.f32.gmra.mxu0 %v2012
    %v2080 = vpop.f32.mrf.mxu0
    %v2081 = vadd.f32 %v2008, %v2080
    %v2082 = vpop.f32.mrf.mxu0
    %2083 = vdwg.mxu0
    %vm2084 = vcmask 74752
    %2085 = vst.msk [vmem:[#allocation4] sm:$0x3] %vm2084, %v2081
    // Predicated region
    $region46: #{customized_cnn_forward.1} parent=1 // pred_check
      _
    $region47: #{customized_cnn_forward.1} parent=1 // pred_check_branch
      %2087 = sbr.rel (0) target = $region49
    $region48: #{customized_cnn_forward.1} parent=1 // pred_region
      %s2089 = ssub.s32 32, 32
      %2090 = vsyncadd [#allocation5], %s2089
      %s2092 = sshll.u32 [#allocation4], 4
      %s2093 = int_to_ptr.vmem [resolvable:$true] %s2092
      %2095 = dma.vmem_to_hbm [thread:$0]  %s2093, 32, %s11, [#allocation5]
    $region49: #{customized_cnn_forward.1} parent=1 // pred_fallthru
      _
    // Predicated region
    $region50: #{customized_cnn_forward.1} parent=1 // pred_check
      _
    $region51: #{customized_cnn_forward.1} parent=1 // pred_check_branch
      %2097 = sbr.rel (0) target = $region53
    $region52: #{customized_cnn_forward.1} parent=1 // pred_region
      %2098 = dma.done [#allocation5], 32
    $region53: #{customized_cnn_forward.1} parent=1 // pred_fallthru
      _
    %2099 = vsyncpa [#allocation5], 1

</llo_original>
